<compile_context>
chip_gen: v6e
topology: v6e:2x2x1
jax: 0.10.0
libtpu: 0.0.40
codegen_flags: <defaults>
</compile_context>

<pallas_src>
import functools
import numpy as np

import jax
import jax.numpy as jnp
from jax.experimental import pallas as pl
from jax.experimental.pallas import tpu as pltpu


# -----------------------------------------------------------------------------
# Pass 1: spatial shift + 1x1 conv, streamed over row tiles; accumulates the
#         per-batch global sum (for the average pool) across tiles.
# -----------------------------------------------------------------------------
def _shift_conv_kernel(x_ref, xprev_ref, xnext_ref, em_ref, gm_ref, w_ref, b_ref,
                       y_ref, pool_ref, *, img_w, lanes):
    """One (batch, row-tile) step.
       x_ref     (C, L)      current tile: channels on sublanes, flat pixels on lanes
       xprev_ref (C, 8, W)   8-row chunk whose row 7 is the image row just above the tile
       xnext_ref (C, 8, W)   8-row chunk whose row 0 is the image row just below the tile
       em_ref    (4, L)      edge masks per pixel: [w!=W-1, w!=0, h!=H-1, h!=0]
       gm_ref    (C, 8)      one-hot channel-group masks in lanes 0..4
       w_ref     (C, C)      1x1 conv weight (Cout, Cin);  b_ref (C, 1) bias
       y_ref     (C, L)      conv output tile
       pool_ref  (C, 128)    per-batch running sum over all pixels (accumulator)
    """
    x = x_ref[...]
    em = em_ref[...]
    gm = gm_ref[...]
    prev_row = xprev_ref[...][:, 7, :]          # (C, W) image row above the tile
    next_row = xnext_ref[...][:, 0, :]          # (C, W) image row below the tile

    # Fixed depthwise 3x3 (single 1 per group) == spatial shift with zero padding.
    s0 = jnp.roll(x, -1, axis=1) * em[0:1, :]                                    # in[h, w+1]
    s1 = jnp.roll(x, 1, axis=1) * em[1:2, :]                                     # in[h, w-1]
    s2 = jnp.concatenate([x[:, img_w:], next_row], axis=1) * em[2:3, :]          # in[h+1, w]
    s3 = jnp.concatenate([prev_row, x[:, :lanes - img_w]], axis=1) * em[3:4, :]  # in[h-1, w]
    shifted = (gm[:, 0:1] * s0 + gm[:, 1:2] * s1 + gm[:, 2:3] * s2 +
               gm[:, 3:4] * s3 + gm[:, 4:5] * x)

    # 1x1 conv == (Cout, Cin) @ (Cin, L) on the MXU; output tile is lane-dense.
    y = jnp.dot(w_ref[...], shifted, preferred_element_type=jnp.float32) + b_ref[...]
    y_ref[...] = y.astype(y_ref.dtype)

    # Partial global-average-pool accumulation (sum; divided by H*W in pass 2).
    @pl.when(pl.program_id(1) == 0)
    def _():
        pool_ref[...] = jnp.zeros_like(pool_ref)
    pool_ref[...] = pool_ref[...] + jnp.sum(y, axis=1, keepdims=True)


# -----------------------------------------------------------------------------
# Pass 2: channel attention (tiny MLP on the pooled sums) + per-channel scaling,
#         streamed over the same row tiles of y.
# -----------------------------------------------------------------------------
def _ca_scale_kernel(y_ref, pool_ref, wd1t_ref, bd1_ref, wd2_ref, bd2_ref, o_ref,
                     *, inv_hw):
    y = y_ref[...]                                           # (C, L)
    pool = pool_ref[...][:, 0:1] * inv_hw                    # (C, 1) global mean
    z1 = jnp.maximum(jnp.sum(wd1t_ref[...] * pool, axis=0, keepdims=True)
                     + bd1_ref[...], 0.0)                    # (1, Cr)
    scale = jax.nn.sigmoid(jnp.sum(wd2_ref[...] * z1, axis=1, keepdims=True)
                           + bd2_ref[...])                   # (C, 1)
    o_ref[...] = (y * scale).astype(o_ref.dtype)


# -----------------------------------------------------------------------------
# Host wrapper
# -----------------------------------------------------------------------------
def _choose_rows(H, W, C, budget_bytes=16 * 2 ** 20):
    """Largest 8-multiple row-tile dividing H whose double-buffered x+y blocks
       fit the budget and whose lane width is 128-aligned (or the full image)."""
    max_rows = budget_bytes // (16 * C * W)          # 4 blocks (x*2 + y*2) * 4 B
    max_rows = max(8, (min(H, max_rows) // 8) * 8)
    for cand in range(max_rows, 7, -8):
        if H % cand == 0 and (cand == H or (cand * W) % 128 == 0):
            return cand
    return H                                          # safe fallback: single tile


def _vmem_limit_bytes(C, L, W):
    est = 4 * (4 * C * L                 # x + y tiles, double buffered
               + 4 * C * 8 * W           # two 8-row halo blocks, double buffered
               + 2 * 4 * L               # edge-mask tile
               + 2 * C * 128             # pool accumulator block
               + 2 * (C * C + 2 * C * 128 + C * 8))   # weights / bias / group masks
    # Footprint-derived, capped below v7x's 64 MiB physical VMEM.
    return int(min(56 * 2 ** 20, max(4 * est, 16 * 2 ** 20)))


def elrcab_forward(x_nchw, params, rows_per_tile=None):
    """x_nchw: (B, C, H, W) float32.  params = (w1x1(C,C), b1x1(C,), wd1(Cr,C),
       bd1(Cr,), wd2(C,Cr), bd2(C,)).  Returns (B, C, H, W) float32."""
    w1x1, b1x1, wd1, bd1, wd2, bd2 = params
    B, C, H, W = x_nchw.shape
    HW = H * W
    Cr = wd1.shape[0]
    assert H % 8 == 0, "row tiling uses 8-row halo blocks; H must be a multiple of 8"

    R = _choose_rows(H, W, C) if rows_per_tile is None else int(rows_per_tile)
    assert H % R == 0 and R % 8 == 0
    assert R == H or (R * W) % 128 == 0, "tile lane width must be 128-aligned"
    L = R * W                    # lanes per tile (flattened pixels)
    T = H // R                   # number of row tiles
    RB = R // 8                  # tile height in 8-row halo chunks
    HB = H // 8

    f32 = jnp.float32
    x3 = x_nchw.reshape(B, C, HW).astype(f32)     # main streaming view (lane-dense)
    x4 = x_nchw.reshape(B, C, H, W).astype(f32)   # 8-row halo view

    # Host-precomputed constants.
    w_idx = np.arange(HW) % W
    h_idx = np.arange(HW) // W
    em = np.stack([(w_idx != W - 1), (w_idx != 0),
                   (h_idx != H - 1), (h_idx != 0)], axis=0).astype(np.float32)  # (4, HW)
    g = C // 5
    gm = np.zeros((C, 8), np.float32)
    for k in range(4):
        gm[k * g:(k + 1) * g, k] = 1.0
    gm[4 * g:, 4] = 1.0                                                          # identity group

    vmem_limit = _vmem_limit_bytes(C, L, W)

    y_flat, pool_sums = pl.pallas_call(
        functools.partial(_shift_conv_kernel, img_w=W, lanes=L),
        out_shape=(jax.ShapeDtypeStruct((B, C, HW), f32),
                   jax.ShapeDtypeStruct((B, C, 128), f32)),
        grid=(B, T),
        in_specs=[
            pl.BlockSpec((None, C, L), lambda b, t: (b, 0, t)),
            pl.BlockSpec((None, C, 8, W),
                         lambda b, t: (b, 0, jnp.maximum(t * RB - 1, 0), 0)),
            pl.BlockSpec((None, C, 8, W),
                         lambda b, t: (b, 0, jnp.minimum((t + 1) * RB, HB - 1), 0)),
            pl.BlockSpec((4, L), lambda b, t: (0, t)),
            pl.BlockSpec((C, 8), lambda b, t: (0, 0)),
            pl.BlockSpec((C, C), lambda b, t: (0, 0)),
            pl.BlockSpec((C, 1), lambda b, t: (0, 0)),
        ],
        out_specs=(pl.BlockSpec((None, C, L), lambda b, t: (b, 0, t)),
                   pl.BlockSpec((None, C, 128), lambda b, t: (b, 0, 0))),
        compiler_params=pltpu.CompilerParams(
            dimension_semantics=("parallel", "arbitrary"),
            vmem_limit_bytes=vmem_limit),
    )(x3, x4, x4, jnp.asarray(em), jnp.asarray(gm),
      jnp.asarray(w1x1, f32), jnp.asarray(b1x1, f32).reshape(C, 1))

    out_flat = pl.pallas_call(
        functools.partial(_ca_scale_kernel, inv_hw=1.0 / float(HW)),
        out_shape=jax.ShapeDtypeStruct((B, C, HW), f32),
        grid=(B, T),
        in_specs=[
            pl.BlockSpec((None, C, L), lambda b, t: (b, 0, t)),
            pl.BlockSpec((None, C, 128), lambda b, t: (b, 0, 0)),
            pl.BlockSpec((C, Cr), lambda b, t: (0, 0)),
            pl.BlockSpec((1, Cr), lambda b, t: (0, 0)),
            pl.BlockSpec((C, Cr), lambda b, t: (0, 0)),
            pl.BlockSpec((C, 1), lambda b, t: (0, 0)),
        ],
        out_specs=pl.BlockSpec((None, C, L), lambda b, t: (b, 0, t)),
        compiler_params=pltpu.CompilerParams(
            dimension_semantics=("parallel", "parallel"),
            vmem_limit_bytes=vmem_limit),
    )(y_flat, pool_sums,
      jnp.asarray(wd1, f32).T, jnp.asarray(bd1, f32).reshape(1, Cr),
      jnp.asarray(wd2, f32), jnp.asarray(bd2, f32).reshape(C, 1))

    return out_flat.reshape(B, C, H, W)


# -----------------------------------------------------------------------------
# Pure-JAX reference (NCHW), mirrors the PyTorch module exactly.
# -----------------------------------------------------------------------------
def elrcab_reference(x, params):
    w1x1, b1x1, wd1, bd1, wd2, bd2 = params
    B, C, H, W = x.shape
    g = C // 5
    xp = jnp.pad(x, ((0, 0), (0, 0), (1, 1), (1, 1)))
    s_l = xp[:, :, 1:H + 1, 2:W + 2]    # in[h, w+1]
    s_r = xp[:, :, 1:H + 1, 0:W]        # in[h, w-1]
    s_u = xp[:, :, 2:H + 2, 1:W + 1]    # in[h+1, w]
    s_d = xp[:, :, 0:H, 1:W + 1]        # in[h-1, w]
    shifted = jnp.concatenate(
        [s_l[:, 0:g], s_r[:, g:2 * g], s_u[:, 2 * g:3 * g],
         s_d[:, 3 * g:4 * g], x[:, 4 * g:]], axis=1)
    y = jnp.einsum('oc,bchw->bohw', w1x1, shifted) + b1x1[None, :, None, None]
    pool = y.mean(axis=(2, 3))                              # (B, C)
    z1 = jax.nn.relu(pool @ wd1.T + bd1)                    # (B, Cr)
    z2 = jax.nn.sigmoid(z1 @ wd2.T + bd2)                   # (B, C)
    return y * z2[:, :, None, None]


if __name__ == "__main__":
    B, C, H, W = 2, 32, 16, 16        # C=32 so that C // reduction >= 1
    reduction = 16
    Cr = C // reduction

    key = jax.random.PRNGKey(0)
    ks = jax.random.split(key, 7)
    x = jax.random.normal(ks[0], (B, C, H, W), jnp.float32)
    w1x1 = jax.random.normal(ks[1], (C, C), jnp.float32) * 0.1      # ShiftConv2d.conv weight
    b1x1 = jax.random.normal(ks[2], (C,), jnp.float32) * 0.1        # ShiftConv2d.conv bias
    wd1 = jax.random.normal(ks[3], (Cr, C), jnp.float32) * 0.1      # CALayer.conv_du[0] weight
    bd1 = jax.random.normal(ks[4], (Cr,), jnp.float32) * 0.1        # CALayer.conv_du[0] bias
    wd2 = jax.random.normal(ks[5], (C, Cr), jnp.float32) * 0.1      # CALayer.conv_du[2] weight
    bd2 = jax.random.normal(ks[6], (C,), jnp.float32) * 0.1         # CALayer.conv_du[2] bias
    params = (w1x1, b1x1, wd1, bd1, wd2, bd2)

    # Multi-tile path (2 row-tiles per image): exercises halo rows + cross-tile pooling.
    out_tiled = jax.block_until_ready(elrcab_forward(x, params, rows_per_tile=8))
    # Auto-chosen tile size (single tile at this toy shape).
    out_auto = jax.block_until_ready(elrcab_forward(x, params))

    ref = elrcab_reference(x, params)
    np.testing.assert_allclose(np.asarray(out_tiled), np.asarray(ref), rtol=2e-4, atol=2e-4)
    np.testing.assert_allclose(np.asarray(out_auto), np.asarray(ref), rtol=2e-4, atol=2e-4)
    print("KERNEL_OK")
</pallas_src>

<mosaic_0001>
module attributes {stable_mosaic.version = 11 : i64} {
  func.func @_shift_conv_kernel(%arg0: i32, %arg1: i32, %arg2: memref<1x32x128xf32, #tpu.memory_space<vmem>>, %arg3: memref<1x32x8x16xf32, #tpu.memory_space<vmem>>, %arg4: memref<1x32x8x16xf32, #tpu.memory_space<vmem>>, %arg5: memref<4x128xf32, #tpu.memory_space<vmem>>, %arg6: memref<32x8xf32, #tpu.memory_space<vmem>>, %arg7: memref<32x32xf32, #tpu.memory_space<vmem>>, %arg8: memref<32x1xf32, #tpu.memory_space<vmem>>, %arg9: memref<1x32x128xf32, #tpu.memory_space<vmem>>, %arg10: memref<1x32x128xf32, #tpu.memory_space<vmem>>) attributes {dimension_semantics = [#tpu.dimension_semantics<parallel>, #tpu.dimension_semantics<arbitrary>], iteration_bounds = array<i64: 2, 2>, scalar_prefetch = 0 : i64, scratch_operands = 0 : i64, tpu.core_type = #tpu.core_type<tc>, window_params = [{transform_indices = @transform_0, window_bounds = array<i64: 1, 32, 128>}, {transform_indices = @transform_1, window_bounds = array<i64: 1, 32, 8, 16>}, {transform_indices = @transform_2, window_bounds = array<i64: 1, 32, 8, 16>}, {transform_indices = @transform_3, window_bounds = array<i64: 4, 128>}, {pipeline_mode = #tpu.pipeline_mode<synchronous>, transform_indices = @transform_4, window_bounds = array<i64: 32, 8>}, {pipeline_mode = #tpu.pipeline_mode<synchronous>, transform_indices = @transform_5, window_bounds = array<i64: 32, 32>}, {pipeline_mode = #tpu.pipeline_mode<synchronous>, transform_indices = @transform_6, window_bounds = array<i64: 32, 1>}, {transform_indices = @transform_7, window_bounds = array<i64: 1, 32, 128>}, {transform_indices = @transform_8, window_bounds = array<i64: 1, 32, 128>}]} {
    %c0 = arith.constant 0 : index
    %c0_0 = arith.constant 0 : index
    %c0_1 = arith.constant 0 : index
    %0 = vector.load %arg2[%c0, %c0_0, %c0_1] : memref<1x32x128xf32, #tpu.memory_space<vmem>>, vector<1x32x128xf32>
    %1 = vector.shape_cast %0 : vector<1x32x128xf32> to vector<32x128xf32>
    %c0_2 = arith.constant 0 : index
    %c0_3 = arith.constant 0 : index
    %2 = vector.load %arg5[%c0_2, %c0_3] : memref<4x128xf32, #tpu.memory_space<vmem>>, vector<4x128xf32>
    %c0_4 = arith.constant 0 : index
    %c0_5 = arith.constant 0 : index
    %3 = vector.load %arg6[%c0_4, %c0_5] : memref<32x8xf32, #tpu.memory_space<vmem>>, vector<32x8xf32>
    %c0_6 = arith.constant 0 : index
    %c0_7 = arith.constant 0 : index
    %c0_8 = arith.constant 0 : index
    %c0_9 = arith.constant 0 : index
    %4 = vector.load %arg3[%c0_6, %c0_7, %c0_8, %c0_9] : memref<1x32x8x16xf32, #tpu.memory_space<vmem>>, vector<1x32x8x16xf32>
    %5 = vector.shape_cast %4 : vector<1x32x8x16xf32> to vector<32x8x16xf32>
    %6 = vector.extract_strided_slice %5 {offsets = [0, 7, 0], sizes = [32, 1, 16], strides = [1, 1, 1]} : vector<32x8x16xf32> to vector<32x1x16xf32>
    %7 = vector.shape_cast %6 : vector<32x1x16xf32> to vector<32x16xf32>
    %c0_10 = arith.constant 0 : index
    %c0_11 = arith.constant 0 : index
    %c0_12 = arith.constant 0 : index
    %c0_13 = arith.constant 0 : index
    %8 = vector.load %arg4[%c0_10, %c0_11, %c0_12, %c0_13] : memref<1x32x8x16xf32, #tpu.memory_space<vmem>>, vector<1x32x8x16xf32>
    %9 = vector.shape_cast %8 : vector<1x32x8x16xf32> to vector<32x8x16xf32>
    %10 = vector.extract_strided_slice %9 {offsets = [0, 0, 0], sizes = [32, 1, 16], strides = [1, 1, 1]} : vector<32x8x16xf32> to vector<32x1x16xf32>
    %11 = vector.shape_cast %10 : vector<32x1x16xf32> to vector<32x16xf32>
    %12 = vector.extract_strided_slice %1 {offsets = [0, 1], sizes = [32, 127], strides = [1, 1]} : vector<32x128xf32> to vector<32x127xf32>
    %13 = vector.extract_strided_slice %1 {offsets = [0, 0], sizes = [32, 1], strides = [1, 1]} : vector<32x128xf32> to vector<32x1xf32>
    %14 = tpu.concatenate %12, %13 in 1 : vector<32x127xf32>, vector<32x1xf32> -> vector<32x128xf32>
    %15 = vector.extract_strided_slice %2 {offsets = [0, 0], sizes = [1, 128], strides = [1, 1]} : vector<4x128xf32> to vector<1x128xf32>
    %16 = vector.broadcast %15 : vector<1x128xf32> to vector<32x128xf32>
    %17 = arith.mulf %14, %16 : vector<32x128xf32>
    %18 = vector.extract_strided_slice %1 {offsets = [0, 127], sizes = [32, 1], strides = [1, 1]} : vector<32x128xf32> to vector<32x1xf32>
    %19 = vector.extract_strided_slice %1 {offsets = [0, 0], sizes = [32, 127], strides = [1, 1]} : vector<32x128xf32> to vector<32x127xf32>
    %20 = tpu.concatenate %18, %19 in 1 : vector<32x1xf32>, vector<32x127xf32> -> vector<32x128xf32>
    %21 = vector.extract_strided_slice %2 {offsets = [1, 0], sizes = [1, 128], strides = [1, 1]} : vector<4x128xf32> to vector<1x128xf32>
    %22 = vector.broadcast %21 : vector<1x128xf32> to vector<32x128xf32>
    %23 = arith.mulf %20, %22 : vector<32x128xf32>
    %24 = vector.extract_strided_slice %1 {offsets = [0, 16], sizes = [32, 112], strides = [1, 1]} : vector<32x128xf32> to vector<32x112xf32>
    %25 = tpu.concatenate %24, %11 in 1 : vector<32x112xf32>, vector<32x16xf32> -> vector<32x128xf32>
    %26 = vector.extract_strided_slice %2 {offsets = [2, 0], sizes = [1, 128], strides = [1, 1]} : vector<4x128xf32> to vector<1x128xf32>
    %27 = vector.broadcast %26 : vector<1x128xf32> to vector<32x128xf32>
    %28 = arith.mulf %25, %27 : vector<32x128xf32>
    %29 = vector.extract_strided_slice %1 {offsets = [0, 0], sizes = [32, 112], strides = [1, 1]} : vector<32x128xf32> to vector<32x112xf32>
    %30 = tpu.concatenate %7, %29 in 1 : vector<32x16xf32>, vector<32x112xf32> -> vector<32x128xf32>
    %31 = vector.extract_strided_slice %2 {offsets = [3, 0], sizes = [1, 128], strides = [1, 1]} : vector<4x128xf32> to vector<1x128xf32>
    %32 = vector.broadcast %31 : vector<1x128xf32> to vector<32x128xf32>
    %33 = arith.mulf %30, %32 : vector<32x128xf32>
    %34 = vector.extract_strided_slice %3 {offsets = [0, 0], sizes = [32, 1], strides = [1, 1]} : vector<32x8xf32> to vector<32x1xf32>
    %35 = vector.broadcast %34 : vector<32x1xf32> to vector<32x128xf32>
    %36 = arith.mulf %35, %17 : vector<32x128xf32>
    %37 = vector.extract_strided_slice %3 {offsets = [0, 1], sizes = [32, 1], strides = [1, 1]} : vector<32x8xf32> to vector<32x1xf32>
    %38 = vector.broadcast %37 : vector<32x1xf32> to vector<32x128xf32>
    %39 = arith.mulf %38, %23 : vector<32x128xf32>
    %40 = arith.addf %36, %39 : vector<32x128xf32>
    %41 = vector.extract_strided_slice %3 {offsets = [0, 2], sizes = [32, 1], strides = [1, 1]} : vector<32x8xf32> to vector<32x1xf32>
    %42 = vector.broadcast %41 : vector<32x1xf32> to vector<32x128xf32>
    %43 = arith.mulf %42, %28 : vector<32x128xf32>
    %44 = arith.addf %40, %43 : vector<32x128xf32>
    %45 = vector.extract_strided_slice %3 {offsets = [0, 3], sizes = [32, 1], strides = [1, 1]} : vector<32x8xf32> to vector<32x1xf32>
    %46 = vector.broadcast %45 : vector<32x1xf32> to vector<32x128xf32>
    %47 = arith.mulf %46, %33 : vector<32x128xf32>
    %48 = arith.addf %44, %47 : vector<32x128xf32>
    %49 = vector.extract_strided_slice %3 {offsets = [0, 4], sizes = [32, 1], strides = [1, 1]} : vector<32x8xf32> to vector<32x1xf32>
    %50 = vector.broadcast %49 : vector<32x1xf32> to vector<32x128xf32>
    %51 = arith.mulf %50, %1 : vector<32x128xf32>
    %52 = arith.addf %48, %51 : vector<32x128xf32>
    %c0_14 = arith.constant 0 : index
    %c0_15 = arith.constant 0 : index
    %53 = vector.load %arg7[%c0_14, %c0_15] : memref<32x32xf32, #tpu.memory_space<vmem>>, vector<32x32xf32>
    %cst = arith.constant dense<0.000000e+00> : vector<32x128xf32>
    %54 = tpu.matmul %53, %52, %cst {dimension_numbers = #tpu.dot_dimension_numbers<[1], [0], [0], [1], [0, 0, 1, 1], [], []>} : vector<32x32xf32>, vector<32x128xf32>, vector<32x128xf32> -> vector<32x128xf32>
    %c0_16 = arith.constant 0 : index
    %c0_17 = arith.constant 0 : index
    %55 = vector.load %arg8[%c0_16, %c0_17] : memref<32x1xf32, #tpu.memory_space<vmem>>, vector<32x1xf32>
    %56 = vector.broadcast %55 : vector<32x1xf32> to vector<32x128xf32>
    %57 = arith.addf %54, %56 : vector<32x128xf32>
    %c0_18 = arith.constant 0 : index
    %c0_19 = arith.constant 0 : index
    %c0_20 = arith.constant 0 : index
    %58 = vector.load %arg9[%c0_18, %c0_19, %c0_20] : memref<1x32x128xf32, #tpu.memory_space<vmem>>, vector<1x32x128xf32>
    %59 = vector.shape_cast %58 : vector<1x32x128xf32> to vector<32x128xf32>
    %60 = vector.shape_cast %57 : vector<32x128xf32> to vector<1x32x128xf32>
    tpu.vector_store %arg9[%c0_18, %c0_19, %c0_20], %60 {strides = array<i32>} : memref<1x32x128xf32, #tpu.memory_space<vmem>>, vector<1x32x128xf32>,
    %c0_i32 = arith.constant 0 : i32
    %61 = arith.cmpi eq, %arg1, %c0_i32 : i32
    %62 = arith.extui %61 : i1 to i32
    %c0_i32_21 = arith.constant 0 : i32
    %63 = arith.cmpi ne, %62, %c0_i32_21 : i32
    scf.if %63 {
      %cst_29 = arith.constant 0.000000e+00 : f32
      %73 = vector.broadcast %cst_29 : f32 to vector<32x128xf32>
      %c0_30 = arith.constant 0 : index
      %c0_31 = arith.constant 0 : index
      %c0_32 = arith.constant 0 : index
      %74 = vector.load %arg10[%c0_30, %c0_31, %c0_32] : memref<1x32x128xf32, #tpu.memory_space<vmem>>, vector<1x32x128xf32>
      %75 = vector.shape_cast %74 : vector<1x32x128xf32> to vector<32x128xf32>
      %76 = vector.shape_cast %73 : vector<32x128xf32> to vector<1x32x128xf32>
      tpu.vector_store %arg10[%c0_30, %c0_31, %c0_32], %76 {strides = array<i32>} : memref<1x32x128xf32, #tpu.memory_space<vmem>>, vector<1x32x128xf32>,
    } else {
    }
    %c0_22 = arith.constant 0 : index
    %c0_23 = arith.constant 0 : index
    %c0_24 = arith.constant 0 : index
    %64 = vector.load %arg10[%c0_22, %c0_23, %c0_24] : memref<1x32x128xf32, #tpu.memory_space<vmem>>, vector<1x32x128xf32>
    %65 = vector.shape_cast %64 : vector<1x32x128xf32> to vector<32x128xf32>
    %cst_25 = arith.constant dense<0.000000e+00> : vector<32xf32>
    %66 = vector.multi_reduction <add>, %57, %cst_25 [1] : vector<32x128xf32> to vector<32xf32>
    %67 = vector.shape_cast %66 : vector<32xf32> to vector<32x1xf32>
    %68 = vector.broadcast %67 : vector<32x1xf32> to vector<32x128xf32>
    %69 = arith.addf %65, %68 : vector<32x128xf32>
    %c0_26 = arith.constant 0 : index
    %c0_27 = arith.constant 0 : index
    %c0_28 = arith.constant 0 : index
    %70 = vector.load %arg10[%c0_26, %c0_27, %c0_28] : memref<1x32x128xf32, #tpu.memory_space<vmem>>, vector<1x32x128xf32>
    %71 = vector.shape_cast %70 : vector<1x32x128xf32> to vector<32x128xf32>
    %72 = vector.shape_cast %69 : vector<32x128xf32> to vector<1x32x128xf32>
    tpu.vector_store %arg10[%c0_26, %c0_27, %c0_28], %72 {strides = array<i32>} : memref<1x32x128xf32, #tpu.memory_space<vmem>>, vector<1x32x128xf32>,
    return
  }
  func.func @transform_0(%arg0: i32, %arg1: i32) -> (i32, i32, i32) {
    %c0_i32 = arith.constant 0 : i32
    %c0_i32_0 = arith.constant 0 : i32
    return %arg0, %c0_i32, %arg1 : i32, i32, i32
  }
  func.func @transform_1(%arg0: i32, %arg1: i32) -> (i32, i32, i32, i32) {
    %c1_i32 = arith.constant 1 : i32
    %0 = arith.muli %arg1, %c1_i32 : i32
    %c1_i32_0 = arith.constant 1 : i32
    %1 = arith.subi %0, %c1_i32_0 : i32
    %c0_i32 = arith.constant 0 : i32
    %2 = arith.maxsi %1, %c0_i32 : i32
    %c0_i32_1 = arith.constant 0 : i32
    %c0_i32_2 = arith.constant 0 : i32
    %c0_i32_3 = arith.constant 0 : i32
    return %arg0, %c0_i32_1, %2, %c0_i32_2 : i32, i32, i32, i32
  }
  func.func @transform_2(%arg0: i32, %arg1: i32) -> (i32, i32, i32, i32) {
    %c1_i32 = arith.constant 1 : i32
    %0 = arith.addi %arg1, %c1_i32 : i32
    %c1_i32_0 = arith.constant 1 : i32
    %1 = arith.muli %0, %c1_i32_0 : i32
    %c1_i32_1 = arith.constant 1 : i32
    %2 = arith.minsi %1, %c1_i32_1 : i32
    %c0_i32 = arith.constant 0 : i32
    %c0_i32_2 = arith.constant 0 : i32
    %c0_i32_3 = arith.constant 0 : i32
    return %arg0, %c0_i32, %2, %c0_i32_2 : i32, i32, i32, i32
  }
  func.func @transform_3(%arg0: i32, %arg1: i32) -> (i32, i32) {
    %c0_i32 = arith.constant 0 : i32
    %c0_i32_0 = arith.constant 0 : i32
    return %c0_i32, %arg1 : i32, i32
  }
  func.func @transform_4(%arg0: i32, %arg1: i32) -> (i32, i32) {
    %c0_i32 = arith.constant 0 : i32
    %c0_i32_0 = arith.constant 0 : i32
    %c0_i32_1 = arith.constant 0 : i32
    return %c0_i32, %c0_i32_0 : i32, i32
  }
  func.func @transform_5(%arg0: i32, %arg1: i32) -> (i32, i32) {
    %c0_i32 = arith.constant 0 : i32
    %c0_i32_0 = arith.constant 0 : i32
    %c0_i32_1 = arith.constant 0 : i32
    return %c0_i32, %c0_i32_0 : i32, i32
  }
  func.func @transform_6(%arg0: i32, %arg1: i32) -> (i32, i32) {
    %c0_i32 = arith.constant 0 : i32
    %c0_i32_0 = arith.constant 0 : i32
    %c0_i32_1 = arith.constant 0 : i32
    return %c0_i32, %c0_i32_0 : i32, i32
  }
  func.func @transform_7(%arg0: i32, %arg1: i32) -> (i32, i32, i32) {
    %c0_i32 = arith.constant 0 : i32
    %c0_i32_0 = arith.constant 0 : i32
    return %arg0, %c0_i32, %arg1 : i32, i32, i32
  }
  func.func @transform_8(%arg0: i32, %arg1: i32) -> (i32, i32, i32) {
    %c0_i32 = arith.constant 0 : i32
    %c0_i32_0 = arith.constant 0 : i32
    %c0_i32_1 = arith.constant 0 : i32
    return %arg0, %c0_i32, %c0_i32_0 : i32, i32, i32
  }
}

</mosaic_0001>

<llo_original>
// kernel: tpu_custom_call.1
$region0: #{tpu_custom_call.1}
  #allocation0 [shape = 'u32[]', space=smem, size = 0x4, offset = 0x4, fixed_abs, tag = 'smem constant byte address 0x4 - core index']
  #allocation1 [shape = 'u32[144,128]{1,0:T(1,128)}', space=vmem, size = 0x12000, scoped, tag = 'internal scratch']
  %s0 = inlined_call_operand.vmem [shape: f32[2,32,256], index: 0, kind: input, shape index: {}]
  %s1 = inlined_call_operand.vmem [shape: f32[2,32,16,16], index: 1, kind: input, shape index: {}]
  %s2 = inlined_call_operand.vmem [shape: f32[2,32,16,16], index: 2, kind: input, shape index: {}]
  %s3 = inlined_call_operand.vmem [shape: f32[4,256], index: 3, kind: input, shape index: {}]
  %s4 = inlined_call_operand.vmem [shape: f32[32,8], index: 4, kind: input, shape index: {}]
  %s5 = inlined_call_operand.vmem [shape: f32[32,32], index: 5, kind: input, shape index: {}]
  %s6 = inlined_call_operand.vmem [shape: f32[32,1], index: 6, kind: input, shape index: {}]
  %s7 = inlined_call_operand.hbm [shape: f32[2,32,256], index: 7, kind: output, shape index: {0}]
  %s8 = inlined_call_operand.hbm [shape: f32[2,32,128], index: 8, kind: output, shape index: {1}]
  %9 = xla_tuple %s7, %s8
  %s10 = sld [smem:[#allocation0]]
  $region187: #{tpu_custom_call.1} parent=0
    _
  %s12 = ssub.s32 1, %s10
  %s13 = scalar_select 0, %s12, %s10
  $region1: #{tpu_custom_call.1} parent=0
    #allocation2 [shape = 'u8[32768]{0}', space=vmem, size = 0x8000, scoped, tag = 'input window, operand 0']
    #allocation3 [shape = 'u8[262144]{0}', space=vmem, size = 0x40000, scoped, tag = 'input window, operand 1']
    #allocation4 [shape = 'u8[262144]{0}', space=vmem, size = 0x40000, scoped, tag = 'input window, operand 2']
    #allocation5 [shape = 'u8[32768]{0}', space=vmem, size = 0x8000, scoped, tag = 'output window, operand 0']
    #allocation6 [shape = 's32[2]{0}', space=sflag, size = 0x8, scoped, tag = 'scoped memory for tpu_custom_call.1']
    #allocation7 [shape = 'u8[32768]{0}', space=vmem, size = 0x8000, scoped, tag = 'output window, operand 1']
    #allocation8 [shape = 's32[2]{0}', space=sflag, size = 0x8, scoped, tag = 'scoped memory for tpu_custom_call.1']
    %14 = vsyncpa [#allocation6], 0
    %s15 = scalar_lea.sflag [#allocation6], 1
    %16 = vsyncpa %s15, 0
    %17 = vsyncpa [#allocation8], 0
    %s18 = scalar_lea.sflag [#allocation8], 1
    %19 = vsyncpa %s18, 0
    loop: start=0, step=1, limit=6
    $region2: #{tpu_custom_call.1} parent=1 // loop_pre_header
      _
    $region3: #{tpu_custom_call.1} parent=1 // loop_header
      %s21 = sphi 0, %s25
      %p22 = scmp.ge.s32.totalorder %s21, 6
      %s28 = sphi 0, %s40
      %s29 = sphi 0, %s36
      %s30 = sphi 0, %s28
      %s31 = sphi 0, %s29
      %s32 = sphi 0, %s30
      %s33 = sphi 0, %s31
      %s45 = sphi 0, %s47
      %s48 = sphi 0, %s45
      %s49 = sphi 0, %s48
      %s65 = sphi 0, %s49
      %s79 = sphi 0, %s81
      %s82 = sphi 0, %s79
      %s83 = sphi 0, %s82
      %s99 = sphi 0, %s83
      %s113 = sphi 0, %s115
      %s116 = sphi 0, %s113
      %s117 = sphi 0, %s116
      %s133 = sphi 0, %s117
      %s139 = sphi 0, %s141
      %s142 = sphi 0, %s139
      %s143 = sphi 0, %s142
      %s159 = sphi 0, %s143
      %s163 = sphi 0, %s163
      %s165 = sphi 0, %s163
      %s166 = sphi 0, %s165
      %s180 = sphi 0, %s166
      %s184 = sphi 0, %s184
      %s186 = sphi 0, %s184
      %s187 = sphi 0, %s186
      %s201 = sphi 0, %s187
      %s205 = sphi 0, %s205
      %s207 = sphi 0, %s205
      %s208 = sphi 0, %s207
      %s222 = sphi 0, %s208
      %s230 = sphi 0, %s232
      %s233 = sphi 0, %s230
      %s234 = sphi 0, %s233
      %s250 = sphi 0, %s234
      %s256 = sphi 0, %s258
      %s259 = sphi 0, %s256
      %s260 = sphi 0, %s259
      %s276 = sphi 0, %s260
    $region4: #{tpu_custom_call.1} parent=1 // loop_header_branch
      %24 = sbr.rel (%p22) target = $region8
    $region5: #{tpu_custom_call.1} parent=1 // loop_body
      %s26 = ssub.s32 %s21, 1
      %s27 = ssub.s32 %s21, 2
      %s34 = sadd.s32 1, %s29
      %p35 = scmp.ge.s32.totalorder %s34, 2
      %s36 = scalar_select %p35, 0, %s34
      %s37 = sadd.s32 1, %s28
      %s38 = scalar_select %p35, %s37, %s28
      %p39 = scmp.ge.s32.totalorder %s38, 2
      %s40 = scalar_select %p39, 0, %s38
      %s41 = ssub.s32 %s28, %s40
      %s42 = ssub.s32 %s29, %s36
      %s43 = sor.u32 %s41, %s42
      %p44 = scmp.eq.s32.totalorder %s43, 0
      %s46 = sadd.s32 %s45, 1
      %s47 = scalar_select %p44, %s45, %s46
      %p50 = pneg %p44
      %p51 = scmp.eq.s32.totalorder %s21, 3
      %p52 = por %p50, %p51
      %p53 = scmp.ne.s32.totalorder %s45, %s48
      %p54 = scmp.eq.s32.totalorder %s21, 0
      %p55 = por %p53, %p54
      %p56 = scmp.ne.s32.totalorder %s45, %s48
      %p57 = scmp.eq.s32.totalorder %s26, 3
      %p58 = por %p56, %p57
      %p59 = scmp.ne.s32.totalorder %s48, %s49
      %p60 = scmp.eq.s32.totalorder %s26, 0
      %p61 = por %p59, %p60
      %p62 = scmp.ne.s32.totalorder %s48, %s49
      %p63 = scmp.eq.s32.totalorder %s27, 3
      %p64 = por %p62, %p63
      %p66 = scmp.ne.s32.totalorder %s49, %s65
      %p67 = scmp.eq.s32.totalorder %s27, 0
      %p68 = por %p66, %p67
      %s69 = ssub.s32 %s29, 1
      %p70 = scmp.gt.s32.totalorder %s69, 0
      %s71 = scalar_select %p70, %s69, 0
      %s72 = ssub.s32 %s36, 1
      %p73 = scmp.gt.s32.totalorder %s72, 0
      %s74 = scalar_select %p73, %s72, 0
      %s75 = ssub.s32 %s28, %s40
      %s76 = ssub.s32 %s71, %s74
      %s77 = sor.u32 %s75, %s76
      %p78 = scmp.eq.s32.totalorder %s77, 0
      %s80 = sadd.s32 %s79, 1
      %s81 = scalar_select %p78, %s79, %s80
      %p84 = pneg %p78
      %p85 = scmp.eq.s32.totalorder %s21, 3
      %p86 = por %p84, %p85
      %p87 = scmp.ne.s32.totalorder %s79, %s82
      %p88 = scmp.eq.s32.totalorder %s21, 0
      %p89 = por %p87, %p88
      %p90 = scmp.ne.s32.totalorder %s79, %s82
      %p91 = scmp.eq.s32.totalorder %s26, 3
      %p92 = por %p90, %p91
      %p93 = scmp.ne.s32.totalorder %s82, %s83
      %p94 = scmp.eq.s32.totalorder %s26, 0
      %p95 = por %p93, %p94
      %p96 = scmp.ne.s32.totalorder %s82, %s83
      %p97 = scmp.eq.s32.totalorder %s27, 3
      %p98 = por %p96, %p97
      %p100 = scmp.ne.s32.totalorder %s83, %s99
      %p101 = scmp.eq.s32.totalorder %s27, 0
      %p102 = por %p100, %p101
      %s103 = sadd.s32 %s29, 1
      %p104 = scmp.lt.s32.totalorder %s103, 1
      %s105 = scalar_select %p104, %s103, 1
      %s106 = sadd.s32 %s36, 1
      %p107 = scmp.lt.s32.totalorder %s106, 1
      %s108 = scalar_select %p107, %s106, 1
      %s109 = ssub.s32 %s28, %s40
      %s110 = ssub.s32 %s105, %s108
      %s111 = sor.u32 %s109, %s110
      %p112 = scmp.eq.s32.totalorder %s111, 0
      %s114 = sadd.s32 %s113, 1
      %s115 = scalar_select %p112, %s113, %s114
      %p118 = pneg %p112
      %p119 = scmp.eq.s32.totalorder %s21, 3
      %p120 = por %p118, %p119
      %p121 = scmp.ne.s32.totalorder %s113, %s116
      %p122 = scmp.eq.s32.totalorder %s21, 0
      %p123 = por %p121, %p122
      %p124 = scmp.ne.s32.totalorder %s113, %s116
      %p125 = scmp.eq.s32.totalorder %s26, 3
      %p126 = por %p124, %p125
      %p127 = scmp.ne.s32.totalorder %s116, %s117
      %p128 = scmp.eq.s32.totalorder %s26, 0
      %p129 = por %p127, %p128
      %p130 = scmp.ne.s32.totalorder %s116, %s117
      %p131 = scmp.eq.s32.totalorder %s27, 3
      %p132 = por %p130, %p131
      %p134 = scmp.ne.s32.totalorder %s117, %s133
      %p135 = scmp.eq.s32.totalorder %s27, 0
      %p136 = por %p134, %p135
      %s137 = ssub.s32 %s29, %s36
      %p138 = scmp.eq.s32.totalorder %s137, 0
      %s140 = sadd.s32 %s139, 1
      %s141 = scalar_select %p138, %s139, %s140
      %p144 = pneg %p138
      %p145 = scmp.eq.s32.totalorder %s21, 3
      %p146 = por %p144, %p145
      %p147 = scmp.ne.s32.totalorder %s139, %s142
      %p148 = scmp.eq.s32.totalorder %s21, 0
      %p149 = por %p147, %p148
      %p150 = scmp.ne.s32.totalorder %s139, %s142
      %p151 = scmp.eq.s32.totalorder %s26, 3
      %p152 = por %p150, %p151
      %p153 = scmp.ne.s32.totalorder %s142, %s143
      %p154 = scmp.eq.s32.totalorder %s26, 0
      %p155 = por %p153, %p154
      %p156 = scmp.ne.s32.totalorder %s142, %s143
      %p157 = scmp.eq.s32.totalorder %s27, 3
      %p158 = por %p156, %p157
      %p160 = scmp.ne.s32.totalorder %s143, %s159
      %p161 = scmp.eq.s32.totalorder %s27, 0
      %p162 = por %p160, %p161
      %s164 = sadd.s32 %s163, 1
      %p167 = scmp.eq.s32.totalorder %s21, 3
      %p168 = scmp.ne.s32.totalorder %s163, %s165
      %p169 = scmp.eq.s32.totalorder %s21, 0
      %p170 = por %p168, %p169
      %p171 = scmp.ne.s32.totalorder %s163, %s165
      %p172 = scmp.eq.s32.totalorder %s26, 3
      %p173 = por %p171, %p172
      %p174 = scmp.ne.s32.totalorder %s165, %s166
      %p175 = scmp.eq.s32.totalorder %s26, 0
      %p176 = por %p174, %p175
      %p177 = scmp.ne.s32.totalorder %s165, %s166
      %p178 = scmp.eq.s32.totalorder %s27, 3
      %p179 = por %p177, %p178
      %p181 = scmp.ne.s32.totalorder %s166, %s180
      %p182 = scmp.eq.s32.totalorder %s27, 0
      %p183 = por %p181, %p182
      %s185 = sadd.s32 %s184, 1
      %p188 = scmp.eq.s32.totalorder %s21, 3
      %p189 = scmp.ne.s32.totalorder %s184, %s186
      %p190 = scmp.eq.s32.totalorder %s21, 0
      %p191 = por %p189, %p190
      %p192 = scmp.ne.s32.totalorder %s184, %s186
      %p193 = scmp.eq.s32.totalorder %s26, 3
      %p194 = por %p192, %p193
      %p195 = scmp.ne.s32.totalorder %s186, %s187
      %p196 = scmp.eq.s32.totalorder %s26, 0
      %p197 = por %p195, %p196
      %p198 = scmp.ne.s32.totalorder %s186, %s187
      %p199 = scmp.eq.s32.totalorder %s27, 3
      %p200 = por %p198, %p199
      %p202 = scmp.ne.s32.totalorder %s187, %s201
      %p203 = scmp.eq.s32.totalorder %s27, 0
      %p204 = por %p202, %p203
      %s206 = sadd.s32 %s205, 1
      %p209 = scmp.eq.s32.totalorder %s21, 3
      %p210 = scmp.ne.s32.totalorder %s205, %s207
      %p211 = scmp.eq.s32.totalorder %s21, 0
      %p212 = por %p210, %p211
      %p213 = scmp.ne.s32.totalorder %s205, %s207
      %p214 = scmp.eq.s32.totalorder %s26, 3
      %p215 = por %p213, %p214
      %p216 = scmp.ne.s32.totalorder %s207, %s208
      %p217 = scmp.eq.s32.totalorder %s26, 0
      %p218 = por %p216, %p217
      %p219 = scmp.ne.s32.totalorder %s207, %s208
      %p220 = scmp.eq.s32.totalorder %s27, 3
      %p221 = por %p219, %p220
      %p223 = scmp.ne.s32.totalorder %s208, %s222
      %p224 = scmp.eq.s32.totalorder %s27, 0
      %p225 = por %p223, %p224
      %s226 = ssub.s32 %s28, %s40
      %s227 = ssub.s32 %s29, %s36
      %s228 = sor.u32 %s226, %s227
      %p229 = scmp.eq.s32.totalorder %s228, 0
      %s231 = sadd.s32 %s230, 1
      %s232 = scalar_select %p229, %s230, %s231
      %p235 = pneg %p229
      %p236 = scmp.eq.s32.totalorder %s21, 3
      %p237 = por %p235, %p236
      %p238 = scmp.ne.s32.totalorder %s230, %s233
      %p239 = scmp.eq.s32.totalorder %s21, 0
      %p240 = por %p238, %p239
      %p241 = scmp.ne.s32.totalorder %s230, %s233
      %p242 = scmp.eq.s32.totalorder %s26, 3
      %p243 = por %p241, %p242
      %p244 = scmp.ne.s32.totalorder %s233, %s234
      %p245 = scmp.eq.s32.totalorder %s26, 0
      %p246 = por %p244, %p245
      %p247 = scmp.ne.s32.totalorder %s233, %s234
      %p248 = scmp.eq.s32.totalorder %s27, 3
      %p249 = por %p247, %p248
      %p251 = scmp.ne.s32.totalorder %s234, %s250
      %p252 = scmp.eq.s32.totalorder %s27, 0
      %p253 = por %p251, %p252
      %s254 = ssub.s32 %s28, %s40
      %p255 = scmp.eq.s32.totalorder %s254, 0
      %s257 = sadd.s32 %s256, 1
      %s258 = scalar_select %p255, %s256, %s257
      %p261 = pneg %p255
      %p262 = scmp.eq.s32.totalorder %s21, 3
      %p263 = por %p261, %p262
      %p264 = scmp.ne.s32.totalorder %s256, %s259
      %p265 = scmp.eq.s32.totalorder %s21, 0
      %p266 = por %p264, %p265
      %p267 = scmp.ne.s32.totalorder %s256, %s259
      %p268 = scmp.eq.s32.totalorder %s26, 3
      %p269 = por %p267, %p268
      %p270 = scmp.ne.s32.totalorder %s259, %s260
      %p271 = scmp.eq.s32.totalorder %s26, 0
      %p272 = por %p270, %p271
      %p273 = scmp.ne.s32.totalorder %s259, %s260
      %p274 = scmp.eq.s32.totalorder %s27, 3
      %p275 = por %p273, %p274
      %p277 = scmp.ne.s32.totalorder %s260, %s276
      %p278 = scmp.eq.s32.totalorder %s27, 0
      %p279 = por %p277, %p278
      %p280 = scmp.le.s32.totalorder 1, %s21
      %p281 = scmp.lt.s32.totalorder %s21, 5
      %p282 = pnand %p280, %p281
      %p283 = pneg %p282
      // Predicated region
      $region9: #{tpu_custom_call.1} parent=5 // pred_check
        _
      $region10: #{tpu_custom_call.1} parent=5 // pred_check_branch
        %285 = sbr.rel (%p282) target = $region12
      $region11: #{tpu_custom_call.1} parent=5 // pred_region
        %s286 = ssub.s32 %s21, 1
        // Predicated region
        $region13: #{tpu_custom_call.1} parent=11 // pred_check
          %p287 = pneg %p176
        $region14: #{tpu_custom_call.1} parent=11 // pred_check_branch
          %289 = sbr.rel (%p287) target = $region16
        $region15: #{tpu_custom_call.1} parent=11 // pred_region
          _
        $region16: #{tpu_custom_call.1} parent=11 // pred_fallthru
          _
        // Predicated region
        $region17: #{tpu_custom_call.1} parent=11 // pred_check
          %p290 = pneg %p197
        $region18: #{tpu_custom_call.1} parent=11 // pred_check_branch
          %292 = sbr.rel (%p290) target = $region20
        $region19: #{tpu_custom_call.1} parent=11 // pred_region
          _
        $region20: #{tpu_custom_call.1} parent=11 // pred_fallthru
          _
        // Predicated region
        $region21: #{tpu_custom_call.1} parent=11 // pred_check
          %p293 = pneg %p218
        $region22: #{tpu_custom_call.1} parent=11 // pred_check_branch
          %295 = sbr.rel (%p293) target = $region24
        $region23: #{tpu_custom_call.1} parent=11 // pred_region
          _
        $region24: #{tpu_custom_call.1} parent=11 // pred_fallthru
          _
      $region12: #{tpu_custom_call.1} parent=5 // pred_fallthru
        _
      %p296 = scmp.lt.s32.totalorder %s21, 4
      // Predicated region
      $region25: #{tpu_custom_call.1} parent=5 // pred_check
        %p297 = pneg %p296
      $region26: #{tpu_custom_call.1} parent=5 // pred_check_branch
        %299 = sbr.rel (%p297) target = $region28
      $region27: #{tpu_custom_call.1} parent=5 // pred_region
        // Predicated region
        $region29: #{tpu_custom_call.1} parent=27 // pred_check
          %p300 = pneg %p55
        $region30: #{tpu_custom_call.1} parent=27 // pred_check_branch
          %302 = sbr.rel (%p300) target = $region32
        $region31: #{tpu_custom_call.1} parent=27 // pred_region
          %s303 = sand.u32 %s45, 1
          %s304 = sand.u32 %s45, 1
          %s305 = smul.addr %s304, 32
          %s306 = scalar_lea.vmem [#allocation2], %s305
          %s307 = smul.addr %s28, 8
          %s308 = sadd.s32 %s29, %s307
          %s309 = smul.addr %s308, 8
          %s310 = scalar_lea.vmem %s0, %s309
          // Predicated region
          $region33: #{tpu_custom_call.1} parent=31 // pred_check
            _
          $region34: #{tpu_custom_call.1} parent=31 // pred_check_branch
            %312 = sbr.rel (0) target = $region36
          $region35: #{tpu_custom_call.1} parent=31 // pred_region
            // Predicated region
            $region37: #{tpu_custom_call.1} parent=35 // pred_check
              _
            $region38: #{tpu_custom_call.1} parent=35 // pred_check_branch
              %314 = sbr.rel (0) target = $region40
            $region39: #{tpu_custom_call.1} parent=35 // pred_region
              // Predicated region
              $region52: #{tpu_custom_call.1} parent=39 // pred_check
                _
              $region53: #{tpu_custom_call.1} parent=39 // pred_check_branch
                %336 = sbr.rel (0) target = $region55
              $region54: #{tpu_custom_call.1} parent=39 // pred_region
                loop: start=0, step=1, limit=1
                $region56: #{tpu_custom_call.1} parent=54 // loop_pre_header
                  _
                $region57: #{tpu_custom_call.1} parent=54 // loop_header
                  %s338 = sphi 0, %s342
                  %p339 = scmp.ge.s32.totalorder %s338, 1
                  %s343 = sphi %s310, %s310
                  %s344 = sphi %s306, %s306
                $region58: #{tpu_custom_call.1} parent=54 // loop_header_branch
                  %341 = sbr.rel (%p339) target = $region62
                $region59: #{tpu_custom_call.1} parent=54 // loop_body
                  %v345 = vld [vmem:[%s343] sm:$0xff]
                  %346 = vst [vmem:[%s344] sm:$0xff] %v345
                  %v347 = vld [vmem:[%s343 + $0x10] sm:$0xff]
                  %348 = vst [vmem:[%s344 + $0x8] sm:$0xff] %v347
                  %v349 = vld [vmem:[%s343 + $0x20] sm:$0xff]
                  %350 = vst [vmem:[%s344 + $0x10] sm:$0xff] %v349
                  %v351 = vld [vmem:[%s343 + $0x30] sm:$0xff]
                  %352 = vst [vmem:[%s344 + $0x18] sm:$0xff] %v351
                $region60: #{tpu_custom_call.1} parent=54 // loop_footer
                  %s342 = sadd.s32 1, %s338
                $region61: #{tpu_custom_call.1} parent=54 // loop_footer_branch
                  %337 = sbr.rel target = $region57
                $region62: #{tpu_custom_call.1} parent=54 // loop_exit
                  _
              $region55: #{tpu_custom_call.1} parent=39 // pred_fallthru
                _
              // Predicated region
              $region63: #{tpu_custom_call.1} parent=39 // pred_check
                _
              $region64: #{tpu_custom_call.1} parent=39 // pred_check_branch
                %354 = sbr.rel target = $region66
              $region65: #{tpu_custom_call.1} parent=39 // pred_region
                _
              $region66: #{tpu_custom_call.1} parent=39 // pred_fallthru
                _
            $region40: #{tpu_custom_call.1} parent=35 // pred_fallthru
              _
            // Predicated region
            $region41: #{tpu_custom_call.1} parent=35 // pred_check
              _
            $region42: #{tpu_custom_call.1} parent=35 // pred_check_branch
              %316 = sbr.rel target = $region44
            $region43: #{tpu_custom_call.1} parent=35 // pred_region
              %s318 = ssub.s32 256, 1
              loop: start=0, step=1, limit=1
              $region45: #{tpu_custom_call.1} parent=43 // loop_pre_header
                _
              $region46: #{tpu_custom_call.1} parent=43 // loop_header
                %s320 = sphi 0, %s324
                %p321 = scmp.ge.s32.totalorder %s320, 1
                %s325 = sphi %s310, %s310
                %s326 = sphi %s306, %s306
              $region47: #{tpu_custom_call.1} parent=43 // loop_header_branch
                %323 = sbr.rel (%p321) target = $region51
              $region48: #{tpu_custom_call.1} parent=43 // loop_body
                %v327 = vld [vmem:[%s325] sm:%s318]
                %328 = vst [vmem:[%s326] sm:%s318] %v327
                %v329 = vld [vmem:[%s325 + $0x10] sm:%s318]
                %330 = vst [vmem:[%s326 + $0x8] sm:%s318] %v329
                %v331 = vld [vmem:[%s325 + $0x20] sm:%s318]
                %332 = vst [vmem:[%s326 + $0x10] sm:%s318] %v331
                %v333 = vld [vmem:[%s325 + $0x30] sm:%s318]
                %334 = vst [vmem:[%s326 + $0x18] sm:%s318] %v333
              $region49: #{tpu_custom_call.1} parent=43 // loop_footer
                %s324 = sadd.s32 1, %s320
              $region50: #{tpu_custom_call.1} parent=43 // loop_footer_branch
                %319 = sbr.rel target = $region46
              $region51: #{tpu_custom_call.1} parent=43 // loop_exit
                _
            $region44: #{tpu_custom_call.1} parent=35 // pred_fallthru
              _
          $region36: #{tpu_custom_call.1} parent=31 // pred_fallthru
            _
          %355 = vnop
        $region32: #{tpu_custom_call.1} parent=27 // pred_fallthru
          _
        // Predicated region
        $region67: #{tpu_custom_call.1} parent=27 // pred_check
          %p356 = pneg %p89
        $region68: #{tpu_custom_call.1} parent=27 // pred_check_branch
          %358 = sbr.rel (%p356) target = $region70
        $region69: #{tpu_custom_call.1} parent=27 // pred_region
          %s359 = sand.u32 %s79, 1
          %s360 = sand.u32 %s79, 1
          %s361 = smul.addr %s360, 256
          %s362 = scalar_lea.vmem [#allocation3], %s361
          %s363 = ssub.s32 %s29, 1
          %p364 = scmp.gt.s32.totalorder %s363, 0
          %s365 = scalar_select %p364, %s363, 0
          %s366 = smul.addr %s28, 64
          %s367 = sadd.s32 %s365, %s366
          %s368 = smul.addr %s367, 8
          %s369 = scalar_lea.vmem %s1, %s368
          // Predicated region
          $region71: #{tpu_custom_call.1} parent=69 // pred_check
            _
          $region72: #{tpu_custom_call.1} parent=69 // pred_check_branch
            %371 = sbr.rel (0) target = $region74
          $region73: #{tpu_custom_call.1} parent=69 // pred_region
            // Predicated region
            $region75: #{tpu_custom_call.1} parent=73 // pred_check
              _
            $region76: #{tpu_custom_call.1} parent=73 // pred_check_branch
              %373 = sbr.rel (0) target = $region78
            $region77: #{tpu_custom_call.1} parent=73 // pred_region
              // Predicated region
              $region90: #{tpu_custom_call.1} parent=77 // pred_check
                _
              $region91: #{tpu_custom_call.1} parent=77 // pred_check_branch
                %451 = sbr.rel (0) target = $region93
              $region92: #{tpu_custom_call.1} parent=77 // pred_region
                loop: start=0, step=1, limit=1
                $region94: #{tpu_custom_call.1} parent=92 // loop_pre_header
                  _
                $region95: #{tpu_custom_call.1} parent=92 // loop_header
                  %s453 = sphi 0, %s457
                  %p454 = scmp.ge.s32.totalorder %s453, 1
                  %s458 = sphi %s369, %s369
                  %s459 = sphi %s362, %s362
                $region96: #{tpu_custom_call.1} parent=92 // loop_header_branch
                  %456 = sbr.rel (%p454) target = $region100
                $region97: #{tpu_custom_call.1} parent=92 // loop_body
                  %v460 = vld [vmem:[%s458] sm:$0xff]
                  %461 = vst [vmem:[%s459] sm:$0xff] %v460
                  %v462 = vld [vmem:[%s458 + $0x10] sm:$0xff]
                  %463 = vst [vmem:[%s459 + $0x8] sm:$0xff] %v462
                  %v464 = vld [vmem:[%s458 + $0x20] sm:$0xff]
                  %465 = vst [vmem:[%s459 + $0x10] sm:$0xff] %v464
                  %v466 = vld [vmem:[%s458 + $0x30] sm:$0xff]
                  %467 = vst [vmem:[%s459 + $0x18] sm:$0xff] %v466
                  %v468 = vld [vmem:[%s458 + $0x40] sm:$0xff]
                  %469 = vst [vmem:[%s459 + $0x20] sm:$0xff] %v468
                  %v470 = vld [vmem:[%s458 + $0x50] sm:$0xff]
                  %471 = vst [vmem:[%s459 + $0x28] sm:$0xff] %v470
                  %v472 = vld [vmem:[%s458 + $0x60] sm:$0xff]
                  %473 = vst [vmem:[%s459 + $0x30] sm:$0xff] %v472
                  %v474 = vld [vmem:[%s458 + $0x70] sm:$0xff]
                  %475 = vst [vmem:[%s459 + $0x38] sm:$0xff] %v474
                  %v476 = vld [vmem:[%s458 + $0x80] sm:$0xff]
                  %477 = vst [vmem:[%s459 + $0x40] sm:$0xff] %v476
                  %v478 = vld [vmem:[%s458 + $0x90] sm:$0xff]
                  %479 = vst [vmem:[%s459 + $0x48] sm:$0xff] %v478
                  %v480 = vld [vmem:[%s458 + $0xa0] sm:$0xff]
                  %481 = vst [vmem:[%s459 + $0x50] sm:$0xff] %v480
                  %v482 = vld [vmem:[%s458 + $0xb0] sm:$0xff]
                  %483 = vst [vmem:[%s459 + $0x58] sm:$0xff] %v482
                  %v484 = vld [vmem:[%s458 + $0xc0] sm:$0xff]
                  %485 = vst [vmem:[%s459 + $0x60] sm:$0xff] %v484
                  %v486 = vld [vmem:[%s458 + $0xd0] sm:$0xff]
                  %487 = vst [vmem:[%s459 + $0x68] sm:$0xff] %v486
                  %v488 = vld [vmem:[%s458 + $0xe0] sm:$0xff]
                  %489 = vst [vmem:[%s459 + $0x70] sm:$0xff] %v488
                  %v490 = vld [vmem:[%s458 + $0xf0] sm:$0xff]
                  %491 = vst [vmem:[%s459 + $0x78] sm:$0xff] %v490
                  %v492 = vld [vmem:[%s458 + $0x100] sm:$0xff]
                  %493 = vst [vmem:[%s459 + $0x80] sm:$0xff] %v492
                  %v494 = vld [vmem:[%s458 + $0x110] sm:$0xff]
                  %495 = vst [vmem:[%s459 + $0x88] sm:$0xff] %v494
                  %v496 = vld [vmem:[%s458 + $0x120] sm:$0xff]
                  %497 = vst [vmem:[%s459 + $0x90] sm:$0xff] %v496
                  %v498 = vld [vmem:[%s458 + $0x130] sm:$0xff]
                  %499 = vst [vmem:[%s459 + $0x98] sm:$0xff] %v498
                  %v500 = vld [vmem:[%s458 + $0x140] sm:$0xff]
                  %501 = vst [vmem:[%s459 + $0xa0] sm:$0xff] %v500
                  %v502 = vld [vmem:[%s458 + $0x150] sm:$0xff]
                  %503 = vst [vmem:[%s459 + $0xa8] sm:$0xff] %v502
                  %v504 = vld [vmem:[%s458 + $0x160] sm:$0xff]
                  %505 = vst [vmem:[%s459 + $0xb0] sm:$0xff] %v504
                  %v506 = vld [vmem:[%s458 + $0x170] sm:$0xff]
                  %507 = vst [vmem:[%s459 + $0xb8] sm:$0xff] %v506
                  %v508 = vld [vmem:[%s458 + $0x180] sm:$0xff]
                  %509 = vst [vmem:[%s459 + $0xc0] sm:$0xff] %v508
                  %v510 = vld [vmem:[%s458 + $0x190] sm:$0xff]
                  %511 = vst [vmem:[%s459 + $0xc8] sm:$0xff] %v510
                  %v512 = vld [vmem:[%s458 + $0x1a0] sm:$0xff]
                  %513 = vst [vmem:[%s459 + $0xd0] sm:$0xff] %v512
                  %v514 = vld [vmem:[%s458 + $0x1b0] sm:$0xff]
                  %515 = vst [vmem:[%s459 + $0xd8] sm:$0xff] %v514
                  %v516 = vld [vmem:[%s458 + $0x1c0] sm:$0xff]
                  %517 = vst [vmem:[%s459 + $0xe0] sm:$0xff] %v516
                  %v518 = vld [vmem:[%s458 + $0x1d0] sm:$0xff]
                  %519 = vst [vmem:[%s459 + $0xe8] sm:$0xff] %v518
                  %v520 = vld [vmem:[%s458 + $0x1e0] sm:$0xff]
                  %521 = vst [vmem:[%s459 + $0xf0] sm:$0xff] %v520
                  %v522 = vld [vmem:[%s458 + $0x1f0] sm:$0xff]
                  %523 = vst [vmem:[%s459 + $0xf8] sm:$0xff] %v522
                $region98: #{tpu_custom_call.1} parent=92 // loop_footer
                  %s457 = sadd.s32 1, %s453
                $region99: #{tpu_custom_call.1} parent=92 // loop_footer_branch
                  %452 = sbr.rel target = $region95
                $region100: #{tpu_custom_call.1} parent=92 // loop_exit
                  _
              $region93: #{tpu_custom_call.1} parent=77 // pred_fallthru
                _
              // Predicated region
              $region101: #{tpu_custom_call.1} parent=77 // pred_check
                _
              $region102: #{tpu_custom_call.1} parent=77 // pred_check_branch
                %525 = sbr.rel target = $region104
              $region103: #{tpu_custom_call.1} parent=77 // pred_region
                _
              $region104: #{tpu_custom_call.1} parent=77 // pred_fallthru
                _
            $region78: #{tpu_custom_call.1} parent=73 // pred_fallthru
              _
            // Predicated region
            $region79: #{tpu_custom_call.1} parent=73 // pred_check
              _
            $region80: #{tpu_custom_call.1} parent=73 // pred_check_branch
              %375 = sbr.rel target = $region82
            $region81: #{tpu_custom_call.1} parent=73 // pred_region
              %s377 = ssub.s32 256, 1
              loop: start=0, step=1, limit=1
              $region83: #{tpu_custom_call.1} parent=81 // loop_pre_header
                _
              $region84: #{tpu_custom_call.1} parent=81 // loop_header
                %s379 = sphi 0, %s383
                %p380 = scmp.ge.s32.totalorder %s379, 1
                %s384 = sphi %s369, %s369
                %s385 = sphi %s362, %s362
              $region85: #{tpu_custom_call.1} parent=81 // loop_header_branch
                %382 = sbr.rel (%p380) target = $region89
              $region86: #{tpu_custom_call.1} parent=81 // loop_body
                %v386 = vld [vmem:[%s384] sm:%s377]
                %387 = vst [vmem:[%s385] sm:%s377] %v386
                %v388 = vld [vmem:[%s384 + $0x10] sm:%s377]
                %389 = vst [vmem:[%s385 + $0x8] sm:%s377] %v388
                %v390 = vld [vmem:[%s384 + $0x20] sm:%s377]
                %391 = vst [vmem:[%s385 + $0x10] sm:%s377] %v390
                %v392 = vld [vmem:[%s384 + $0x30] sm:%s377]
                %393 = vst [vmem:[%s385 + $0x18] sm:%s377] %v392
                %v394 = vld [vmem:[%s384 + $0x40] sm:%s377]
                %395 = vst [vmem:[%s385 + $0x20] sm:%s377] %v394
                %v396 = vld [vmem:[%s384 + $0x50] sm:%s377]
                %397 = vst [vmem:[%s385 + $0x28] sm:%s377] %v396
                %v398 = vld [vmem:[%s384 + $0x60] sm:%s377]
                %399 = vst [vmem:[%s385 + $0x30] sm:%s377] %v398
                %v400 = vld [vmem:[%s384 + $0x70] sm:%s377]
                %401 = vst [vmem:[%s385 + $0x38] sm:%s377] %v400
                %v402 = vld [vmem:[%s384 + $0x80] sm:%s377]
                %403 = vst [vmem:[%s385 + $0x40] sm:%s377] %v402
                %v404 = vld [vmem:[%s384 + $0x90] sm:%s377]
                %405 = vst [vmem:[%s385 + $0x48] sm:%s377] %v404
                %v406 = vld [vmem:[%s384 + $0xa0] sm:%s377]
                %407 = vst [vmem:[%s385 + $0x50] sm:%s377] %v406
                %v408 = vld [vmem:[%s384 + $0xb0] sm:%s377]
                %409 = vst [vmem:[%s385 + $0x58] sm:%s377] %v408
                %v410 = vld [vmem:[%s384 + $0xc0] sm:%s377]
                %411 = vst [vmem:[%s385 + $0x60] sm:%s377] %v410
                %v412 = vld [vmem:[%s384 + $0xd0] sm:%s377]
                %413 = vst [vmem:[%s385 + $0x68] sm:%s377] %v412
                %v414 = vld [vmem:[%s384 + $0xe0] sm:%s377]
                %415 = vst [vmem:[%s385 + $0x70] sm:%s377] %v414
                %v416 = vld [vmem:[%s384 + $0xf0] sm:%s377]
                %417 = vst [vmem:[%s385 + $0x78] sm:%s377] %v416
                %v418 = vld [vmem:[%s384 + $0x100] sm:%s377]
                %419 = vst [vmem:[%s385 + $0x80] sm:%s377] %v418
                %v420 = vld [vmem:[%s384 + $0x110] sm:%s377]
                %421 = vst [vmem:[%s385 + $0x88] sm:%s377] %v420
                %v422 = vld [vmem:[%s384 + $0x120] sm:%s377]
                %423 = vst [vmem:[%s385 + $0x90] sm:%s377] %v422
                %v424 = vld [vmem:[%s384 + $0x130] sm:%s377]
                %425 = vst [vmem:[%s385 + $0x98] sm:%s377] %v424
                %v426 = vld [vmem:[%s384 + $0x140] sm:%s377]
                %427 = vst [vmem:[%s385 + $0xa0] sm:%s377] %v426
                %v428 = vld [vmem:[%s384 + $0x150] sm:%s377]
                %429 = vst [vmem:[%s385 + $0xa8] sm:%s377] %v428
                %v430 = vld [vmem:[%s384 + $0x160] sm:%s377]
                %431 = vst [vmem:[%s385 + $0xb0] sm:%s377] %v430
                %v432 = vld [vmem:[%s384 + $0x170] sm:%s377]
                %433 = vst [vmem:[%s385 + $0xb8] sm:%s377] %v432
                %v434 = vld [vmem:[%s384 + $0x180] sm:%s377]
                %435 = vst [vmem:[%s385 + $0xc0] sm:%s377] %v434
                %v436 = vld [vmem:[%s384 + $0x190] sm:%s377]
                %437 = vst [vmem:[%s385 + $0xc8] sm:%s377] %v436
                %v438 = vld [vmem:[%s384 + $0x1a0] sm:%s377]
                %439 = vst [vmem:[%s385 + $0xd0] sm:%s377] %v438
                %v440 = vld [vmem:[%s384 + $0x1b0] sm:%s377]
                %441 = vst [vmem:[%s385 + $0xd8] sm:%s377] %v440
                %v442 = vld [vmem:[%s384 + $0x1c0] sm:%s377]
                %443 = vst [vmem:[%s385 + $0xe0] sm:%s377] %v442
                %v444 = vld [vmem:[%s384 + $0x1d0] sm:%s377]
                %445 = vst [vmem:[%s385 + $0xe8] sm:%s377] %v444
                %v446 = vld [vmem:[%s384 + $0x1e0] sm:%s377]
                %447 = vst [vmem:[%s385 + $0xf0] sm:%s377] %v446
                %v448 = vld [vmem:[%s384 + $0x1f0] sm:%s377]
                %449 = vst [vmem:[%s385 + $0xf8] sm:%s377] %v448
              $region87: #{tpu_custom_call.1} parent=81 // loop_footer
                %s383 = sadd.s32 1, %s379
              $region88: #{tpu_custom_call.1} parent=81 // loop_footer_branch
                %378 = sbr.rel target = $region84
              $region89: #{tpu_custom_call.1} parent=81 // loop_exit
                _
            $region82: #{tpu_custom_call.1} parent=73 // pred_fallthru
              _
          $region74: #{tpu_custom_call.1} parent=69 // pred_fallthru
            _
          %526 = vnop
        $region70: #{tpu_custom_call.1} parent=27 // pred_fallthru
          _
        // Predicated region
        $region105: #{tpu_custom_call.1} parent=27 // pred_check
          %p527 = pneg %p123
        $region106: #{tpu_custom_call.1} parent=27 // pred_check_branch
          %529 = sbr.rel (%p527) target = $region108
        $region107: #{tpu_custom_call.1} parent=27 // pred_region
          %s530 = sand.u32 %s113, 1
          %s531 = sand.u32 %s113, 1
          %s532 = smul.addr %s531, 256
          %s533 = scalar_lea.vmem [#allocation4], %s532
          %s534 = sadd.s32 %s29, 1
          %p535 = scmp.lt.s32.totalorder %s534, 1
          %s536 = scalar_select %p535, %s534, 1
          %s537 = smul.addr %s28, 64
          %s538 = sadd.s32 %s536, %s537
          %s539 = smul.addr %s538, 8
          %s540 = scalar_lea.vmem %s2, %s539
          // Predicated region
          $region109: #{tpu_custom_call.1} parent=107 // pred_check
            _
          $region110: #{tpu_custom_call.1} parent=107 // pred_check_branch
            %542 = sbr.rel (0) target = $region112
          $region111: #{tpu_custom_call.1} parent=107 // pred_region
            // Predicated region
            $region113: #{tpu_custom_call.1} parent=111 // pred_check
              _
            $region114: #{tpu_custom_call.1} parent=111 // pred_check_branch
              %544 = sbr.rel (0) target = $region116
            $region115: #{tpu_custom_call.1} parent=111 // pred_region
              // Predicated region
              $region128: #{tpu_custom_call.1} parent=115 // pred_check
                _
              $region129: #{tpu_custom_call.1} parent=115 // pred_check_branch
                %622 = sbr.rel (0) target = $region131
              $region130: #{tpu_custom_call.1} parent=115 // pred_region
                loop: start=0, step=1, limit=1
                $region132: #{tpu_custom_call.1} parent=130 // loop_pre_header
                  _
                $region133: #{tpu_custom_call.1} parent=130 // loop_header
                  %s624 = sphi 0, %s628
                  %p625 = scmp.ge.s32.totalorder %s624, 1
                  %s629 = sphi %s540, %s540
                  %s630 = sphi %s533, %s533
                $region134: #{tpu_custom_call.1} parent=130 // loop_header_branch
                  %627 = sbr.rel (%p625) target = $region138
                $region135: #{tpu_custom_call.1} parent=130 // loop_body
                  %v631 = vld [vmem:[%s629] sm:$0xff]
                  %632 = vst [vmem:[%s630] sm:$0xff] %v631
                  %v633 = vld [vmem:[%s629 + $0x10] sm:$0xff]
                  %634 = vst [vmem:[%s630 + $0x8] sm:$0xff] %v633
                  %v635 = vld [vmem:[%s629 + $0x20] sm:$0xff]
                  %636 = vst [vmem:[%s630 + $0x10] sm:$0xff] %v635
                  %v637 = vld [vmem:[%s629 + $0x30] sm:$0xff]
                  %638 = vst [vmem:[%s630 + $0x18] sm:$0xff] %v637
                  %v639 = vld [vmem:[%s629 + $0x40] sm:$0xff]
                  %640 = vst [vmem:[%s630 + $0x20] sm:$0xff] %v639
                  %v641 = vld [vmem:[%s629 + $0x50] sm:$0xff]
                  %642 = vst [vmem:[%s630 + $0x28] sm:$0xff] %v641
                  %v643 = vld [vmem:[%s629 + $0x60] sm:$0xff]
                  %644 = vst [vmem:[%s630 + $0x30] sm:$0xff] %v643
                  %v645 = vld [vmem:[%s629 + $0x70] sm:$0xff]
                  %646 = vst [vmem:[%s630 + $0x38] sm:$0xff] %v645
                  %v647 = vld [vmem:[%s629 + $0x80] sm:$0xff]
                  %648 = vst [vmem:[%s630 + $0x40] sm:$0xff] %v647
                  %v649 = vld [vmem:[%s629 + $0x90] sm:$0xff]
                  %650 = vst [vmem:[%s630 + $0x48] sm:$0xff] %v649
                  %v651 = vld [vmem:[%s629 + $0xa0] sm:$0xff]
                  %652 = vst [vmem:[%s630 + $0x50] sm:$0xff] %v651
                  %v653 = vld [vmem:[%s629 + $0xb0] sm:$0xff]
                  %654 = vst [vmem:[%s630 + $0x58] sm:$0xff] %v653
                  %v655 = vld [vmem:[%s629 + $0xc0] sm:$0xff]
                  %656 = vst [vmem:[%s630 + $0x60] sm:$0xff] %v655
                  %v657 = vld [vmem:[%s629 + $0xd0] sm:$0xff]
                  %658 = vst [vmem:[%s630 + $0x68] sm:$0xff] %v657
                  %v659 = vld [vmem:[%s629 + $0xe0] sm:$0xff]
                  %660 = vst [vmem:[%s630 + $0x70] sm:$0xff] %v659
                  %v661 = vld [vmem:[%s629 + $0xf0] sm:$0xff]
                  %662 = vst [vmem:[%s630 + $0x78] sm:$0xff] %v661
                  %v663 = vld [vmem:[%s629 + $0x100] sm:$0xff]
                  %664 = vst [vmem:[%s630 + $0x80] sm:$0xff] %v663
                  %v665 = vld [vmem:[%s629 + $0x110] sm:$0xff]
                  %666 = vst [vmem:[%s630 + $0x88] sm:$0xff] %v665
                  %v667 = vld [vmem:[%s629 + $0x120] sm:$0xff]
                  %668 = vst [vmem:[%s630 + $0x90] sm:$0xff] %v667
                  %v669 = vld [vmem:[%s629 + $0x130] sm:$0xff]
                  %670 = vst [vmem:[%s630 + $0x98] sm:$0xff] %v669
                  %v671 = vld [vmem:[%s629 + $0x140] sm:$0xff]
                  %672 = vst [vmem:[%s630 + $0xa0] sm:$0xff] %v671
                  %v673 = vld [vmem:[%s629 + $0x150] sm:$0xff]
                  %674 = vst [vmem:[%s630 + $0xa8] sm:$0xff] %v673
                  %v675 = vld [vmem:[%s629 + $0x160] sm:$0xff]
                  %676 = vst [vmem:[%s630 + $0xb0] sm:$0xff] %v675
                  %v677 = vld [vmem:[%s629 + $0x170] sm:$0xff]
                  %678 = vst [vmem:[%s630 + $0xb8] sm:$0xff] %v677
                  %v679 = vld [vmem:[%s629 + $0x180] sm:$0xff]
                  %680 = vst [vmem:[%s630 + $0xc0] sm:$0xff] %v679
                  %v681 = vld [vmem:[%s629 + $0x190] sm:$0xff]
                  %682 = vst [vmem:[%s630 + $0xc8] sm:$0xff] %v681
                  %v683 = vld [vmem:[%s629 + $0x1a0] sm:$0xff]
                  %684 = vst [vmem:[%s630 + $0xd0] sm:$0xff] %v683
                  %v685 = vld [vmem:[%s629 + $0x1b0] sm:$0xff]
                  %686 = vst [vmem:[%s630 + $0xd8] sm:$0xff] %v685
                  %v687 = vld [vmem:[%s629 + $0x1c0] sm:$0xff]
                  %688 = vst [vmem:[%s630 + $0xe0] sm:$0xff] %v687
                  %v689 = vld [vmem:[%s629 + $0x1d0] sm:$0xff]
                  %690 = vst [vmem:[%s630 + $0xe8] sm:$0xff] %v689
                  %v691 = vld [vmem:[%s629 + $0x1e0] sm:$0xff]
                  %692 = vst [vmem:[%s630 + $0xf0] sm:$0xff] %v691
                  %v693 = vld [vmem:[%s629 + $0x1f0] sm:$0xff]
                  %694 = vst [vmem:[%s630 + $0xf8] sm:$0xff] %v693
                $region136: #{tpu_custom_call.1} parent=130 // loop_footer
                  %s628 = sadd.s32 1, %s624
                $region137: #{tpu_custom_call.1} parent=130 // loop_footer_branch
                  %623 = sbr.rel target = $region133
                $region138: #{tpu_custom_call.1} parent=130 // loop_exit
                  _
              $region131: #{tpu_custom_call.1} parent=115 // pred_fallthru
                _
              // Predicated region
              $region139: #{tpu_custom_call.1} parent=115 // pred_check
                _
              $region140: #{tpu_custom_call.1} parent=115 // pred_check_branch
                %696 = sbr.rel target = $region142
              $region141: #{tpu_custom_call.1} parent=115 // pred_region
                _
              $region142: #{tpu_custom_call.1} parent=115 // pred_fallthru
                _
            $region116: #{tpu_custom_call.1} parent=111 // pred_fallthru
              _
            // Predicated region
            $region117: #{tpu_custom_call.1} parent=111 // pred_check
              _
            $region118: #{tpu_custom_call.1} parent=111 // pred_check_branch
              %546 = sbr.rel target = $region120
            $region119: #{tpu_custom_call.1} parent=111 // pred_region
              %s548 = ssub.s32 256, 1
              loop: start=0, step=1, limit=1
              $region121: #{tpu_custom_call.1} parent=119 // loop_pre_header
                _
              $region122: #{tpu_custom_call.1} parent=119 // loop_header
                %s550 = sphi 0, %s554
                %p551 = scmp.ge.s32.totalorder %s550, 1
                %s555 = sphi %s540, %s540
                %s556 = sphi %s533, %s533
              $region123: #{tpu_custom_call.1} parent=119 // loop_header_branch
                %553 = sbr.rel (%p551) target = $region127
              $region124: #{tpu_custom_call.1} parent=119 // loop_body
                %v557 = vld [vmem:[%s555] sm:%s548]
                %558 = vst [vmem:[%s556] sm:%s548] %v557
                %v559 = vld [vmem:[%s555 + $0x10] sm:%s548]
                %560 = vst [vmem:[%s556 + $0x8] sm:%s548] %v559
                %v561 = vld [vmem:[%s555 + $0x20] sm:%s548]
                %562 = vst [vmem:[%s556 + $0x10] sm:%s548] %v561
                %v563 = vld [vmem:[%s555 + $0x30] sm:%s548]
                %564 = vst [vmem:[%s556 + $0x18] sm:%s548] %v563
                %v565 = vld [vmem:[%s555 + $0x40] sm:%s548]
                %566 = vst [vmem:[%s556 + $0x20] sm:%s548] %v565
                %v567 = vld [vmem:[%s555 + $0x50] sm:%s548]
                %568 = vst [vmem:[%s556 + $0x28] sm:%s548] %v567
                %v569 = vld [vmem:[%s555 + $0x60] sm:%s548]
                %570 = vst [vmem:[%s556 + $0x30] sm:%s548] %v569
                %v571 = vld [vmem:[%s555 + $0x70] sm:%s548]
                %572 = vst [vmem:[%s556 + $0x38] sm:%s548] %v571
                %v573 = vld [vmem:[%s555 + $0x80] sm:%s548]
                %574 = vst [vmem:[%s556 + $0x40] sm:%s548] %v573
                %v575 = vld [vmem:[%s555 + $0x90] sm:%s548]
                %576 = vst [vmem:[%s556 + $0x48] sm:%s548] %v575
                %v577 = vld [vmem:[%s555 + $0xa0] sm:%s548]
                %578 = vst [vmem:[%s556 + $0x50] sm:%s548] %v577
                %v579 = vld [vmem:[%s555 + $0xb0] sm:%s548]
                %580 = vst [vmem:[%s556 + $0x58] sm:%s548] %v579
                %v581 = vld [vmem:[%s555 + $0xc0] sm:%s548]
                %582 = vst [vmem:[%s556 + $0x60] sm:%s548] %v581
                %v583 = vld [vmem:[%s555 + $0xd0] sm:%s548]
                %584 = vst [vmem:[%s556 + $0x68] sm:%s548] %v583
                %v585 = vld [vmem:[%s555 + $0xe0] sm:%s548]
                %586 = vst [vmem:[%s556 + $0x70] sm:%s548] %v585
                %v587 = vld [vmem:[%s555 + $0xf0] sm:%s548]
                %588 = vst [vmem:[%s556 + $0x78] sm:%s548] %v587
                %v589 = vld [vmem:[%s555 + $0x100] sm:%s548]
                %590 = vst [vmem:[%s556 + $0x80] sm:%s548] %v589
                %v591 = vld [vmem:[%s555 + $0x110] sm:%s548]
                %592 = vst [vmem:[%s556 + $0x88] sm:%s548] %v591
                %v593 = vld [vmem:[%s555 + $0x120] sm:%s548]
                %594 = vst [vmem:[%s556 + $0x90] sm:%s548] %v593
                %v595 = vld [vmem:[%s555 + $0x130] sm:%s548]
                %596 = vst [vmem:[%s556 + $0x98] sm:%s548] %v595
                %v597 = vld [vmem:[%s555 + $0x140] sm:%s548]
                %598 = vst [vmem:[%s556 + $0xa0] sm:%s548] %v597
                %v599 = vld [vmem:[%s555 + $0x150] sm:%s548]
                %600 = vst [vmem:[%s556 + $0xa8] sm:%s548] %v599
                %v601 = vld [vmem:[%s555 + $0x160] sm:%s548]
                %602 = vst [vmem:[%s556 + $0xb0] sm:%s548] %v601
                %v603 = vld [vmem:[%s555 + $0x170] sm:%s548]
                %604 = vst [vmem:[%s556 + $0xb8] sm:%s548] %v603
                %v605 = vld [vmem:[%s555 + $0x180] sm:%s548]
                %606 = vst [vmem:[%s556 + $0xc0] sm:%s548] %v605
                %v607 = vld [vmem:[%s555 + $0x190] sm:%s548]
                %608 = vst [vmem:[%s556 + $0xc8] sm:%s548] %v607
                %v609 = vld [vmem:[%s555 + $0x1a0] sm:%s548]
                %610 = vst [vmem:[%s556 + $0xd0] sm:%s548] %v609
                %v611 = vld [vmem:[%s555 + $0x1b0] sm:%s548]
                %612 = vst [vmem:[%s556 + $0xd8] sm:%s548] %v611
                %v613 = vld [vmem:[%s555 + $0x1c0] sm:%s548]
                %614 = vst [vmem:[%s556 + $0xe0] sm:%s548] %v613
                %v615 = vld [vmem:[%s555 + $0x1d0] sm:%s548]
                %616 = vst [vmem:[%s556 + $0xe8] sm:%s548] %v615
                %v617 = vld [vmem:[%s555 + $0x1e0] sm:%s548]
                %618 = vst [vmem:[%s556 + $0xf0] sm:%s548] %v617
                %v619 = vld [vmem:[%s555 + $0x1f0] sm:%s548]
                %620 = vst [vmem:[%s556 + $0xf8] sm:%s548] %v619
              $region125: #{tpu_custom_call.1} parent=119 // loop_footer
                %s554 = sadd.s32 1, %s550
              $region126: #{tpu_custom_call.1} parent=119 // loop_footer_branch
                %549 = sbr.rel target = $region122
              $region127: #{tpu_custom_call.1} parent=119 // loop_exit
                _
            $region120: #{tpu_custom_call.1} parent=111 // pred_fallthru
              _
          $region112: #{tpu_custom_call.1} parent=107 // pred_fallthru
            _
          %697 = vnop
        $region108: #{tpu_custom_call.1} parent=27 // pred_fallthru
          _
        // Predicated region
        $region143: #{tpu_custom_call.1} parent=27 // pred_check
          %p698 = pneg %p149
        $region144: #{tpu_custom_call.1} parent=27 // pred_check_branch
          %700 = sbr.rel (%p698) target = $region146
        $region145: #{tpu_custom_call.1} parent=27 // pred_region
          %p701 = scmp.lt.s32.totalorder %s29, 1
          %s702 = scalar_select %p701, %s29, 1
          %s703 = smul.addr %s702, 4
          %s704 = scalar_lea.vmem %s3, %s703
        $region146: #{tpu_custom_call.1} parent=27 // pred_fallthru
          _
      $region28: #{tpu_custom_call.1} parent=5 // pred_fallthru
        _
      %p705 = scmp.le.s32.totalorder 1, %s21
      %p706 = scmp.lt.s32.totalorder %s21, 5
      %p707 = pnand %p705, %p706
      %p708 = pneg %p707
      // Predicated region
      $region147: #{tpu_custom_call.1} parent=5 // pred_check
        _
      $region148: #{tpu_custom_call.1} parent=5 // pred_check_branch
        %710 = sbr.rel (%p707) target = $region150
      $region149: #{tpu_custom_call.1} parent=5 // pred_region
        %s711 = ssub.s32 %s21, 1
        %s712 = sand.u32 %s48, 1
        %s713 = sand.u32 %s48, 1
        %s714 = smul.addr %s713, 32
        %s715 = scalar_lea.vmem [#allocation2], %s714
        // Predicated region
        $region151: #{tpu_custom_call.1} parent=149 // pred_check
          %p716 = pneg %p61
        $region152: #{tpu_custom_call.1} parent=149 // pred_check_branch
          %718 = sbr.rel (%p716) target = $region154
        $region153: #{tpu_custom_call.1} parent=149 // pred_region
          _
        $region154: #{tpu_custom_call.1} parent=149 // pred_fallthru
          _
        %s719 = sand.u32 %s82, 1
        %s720 = sand.u32 %s82, 1
        %s721 = smul.addr %s720, 256
        %s722 = scalar_lea.vmem [#allocation3], %s721
        // Predicated region
        $region155: #{tpu_custom_call.1} parent=149 // pred_check
          %p723 = pneg %p95
        $region156: #{tpu_custom_call.1} parent=149 // pred_check_branch
          %725 = sbr.rel (%p723) target = $region158
        $region157: #{tpu_custom_call.1} parent=149 // pred_region
          _
        $region158: #{tpu_custom_call.1} parent=149 // pred_fallthru
          _
        %s726 = sand.u32 %s116, 1
        %s727 = sand.u32 %s116, 1
        %s728 = smul.addr %s727, 256
        %s729 = scalar_lea.vmem [#allocation4], %s728
        // Predicated region
        $region159: #{tpu_custom_call.1} parent=149 // pred_check
          %p730 = pneg %p129
        $region160: #{tpu_custom_call.1} parent=149 // pred_check_branch
          %732 = sbr.rel (%p730) target = $region162
        $region161: #{tpu_custom_call.1} parent=149 // pred_region
          _
        $region162: #{tpu_custom_call.1} parent=149 // pred_fallthru
          _
        %s733 = sand.u32 %s48, 1
        %s734 = sand.u32 %s48, 1
        %s735 = smul.addr %s734, 32
        %s736 = scalar_lea.vmem [#allocation2], %s735
        %p737 = pneg %p61
        %p738 = pneg %p58
        %s739 = sand.u32 %s82, 1
        %s740 = sand.u32 %s82, 1
        %s741 = smul.addr %s740, 256
        %s742 = scalar_lea.vmem [#allocation3], %s741
        %p743 = pneg %p95
        %p744 = pneg %p92
        %s745 = sand.u32 %s116, 1
        %s746 = sand.u32 %s116, 1
        %s747 = smul.addr %s746, 256
        %s748 = scalar_lea.vmem [#allocation4], %s747
        %p749 = pneg %p129
        %p750 = pneg %p126
        %p751 = scmp.lt.s32.totalorder %s31, 1
        %s752 = scalar_select %p751, %s31, 1
        %s753 = smul.addr %s752, 4
        %s754 = scalar_lea.vmem %s3, %s753
        %p755 = pneg %p155
        %p756 = pneg %p152
        %p757 = pneg %p176
        %p758 = pneg %p173
        %p759 = pneg %p197
        %p760 = pneg %p194
        %p761 = pneg %p218
        %p762 = pneg %p215
        %p763 = pneg %p246
        %p764 = pneg %p243
        %s765 = sand.u32 %s233, 1
        %s766 = scalar_lea.sflag [#allocation6], %s765
        %s767 = sand.u32 %s233, 1
        %s768 = smul.addr %s767, 32
        %s769 = scalar_lea.vmem [#allocation5], %s768
        %p770 = pneg %p272
        %p771 = pneg %p269
        %s772 = sand.u32 %s259, 1
        %s773 = scalar_lea.sflag [#allocation8], %s772
        %s774 = sand.u32 %s259, 1
        %s775 = smul.addr %s774, 32
        %s776 = scalar_lea.vmem [#allocation7], %s775
        %s777 = ssub.s32 %s31, 1
        %p778 = scmp.gt.s32.totalorder %s777, 0
        %s779 = scalar_select %p778, %s777, 0
        %s780 = sadd.s32 %s31, 1
        %p781 = scmp.lt.s32.totalorder %s780, 1
        %s782 = scalar_select %p781, %s780, 1
        %p783 = scmp.lt.s32.totalorder %s31, 1
        %s784 = scalar_select %p783, %s31, 1
        %s785 = smul.addr %s784, 4
        %s786 = scalar_lea.vmem %s3, %s785
        %v787 = vld [vmem:[%s715] sm:$0xff]
        %v788 = vld [vmem:[%s715 + $0x8] sm:$0xff]
        %v789 = vld [vmem:[%s715 + $0x10] sm:$0xff]
        %v790 = vld [vmem:[%s715 + $0x18] sm:$0xff]
        %v791 = vld [vmem:[%s786] sm:$0xf]
        %v792 = vld [vmem:[%s4] sm:$0xff]
        %v793 = vld [vmem:[%s4 + $0x8] sm:$0xff]
        %v794 = vld [vmem:[%s4 + $0x10] sm:$0xff]
        %v795 = vld [vmem:[%s4 + $0x18] sm:$0xff]
        %v796 = vld [vmem:[%s722] sm:$0xff]
        %v797 = vld [vmem:[%s722 + $0x8] sm:$0xff]
        %v798 = vld [vmem:[%s722 + $0x10] sm:$0xff]
        %v799 = vld [vmem:[%s722 + $0x18] sm:$0xff]
        %v800 = vld [vmem:[%s722 + $0x20] sm:$0xff]
        %v801 = vld [vmem:[%s722 + $0x28] sm:$0xff]
        %v802 = vld [vmem:[%s722 + $0x30] sm:$0xff]
        %v803 = vld [vmem:[%s722 + $0x38] sm:$0xff]
        %v804 = vld [vmem:[%s722 + $0x40] sm:$0xff]
        %v805 = vld [vmem:[%s722 + $0x48] sm:$0xff]
        %v806 = vld [vmem:[%s722 + $0x50] sm:$0xff]
        %v807 = vld [vmem:[%s722 + $0x58] sm:$0xff]
        %v808 = vld [vmem:[%s722 + $0x60] sm:$0xff]
        %v809 = vld [vmem:[%s722 + $0x68] sm:$0xff]
        %v810 = vld [vmem:[%s722 + $0x70] sm:$0xff]
        %v811 = vld [vmem:[%s722 + $0x78] sm:$0xff]
        %v812 = vld [vmem:[%s722 + $0x80] sm:$0xff]
        %v813 = vld [vmem:[%s722 + $0x88] sm:$0xff]
        %v814 = vld [vmem:[%s722 + $0x90] sm:$0xff]
        %v815 = vld [vmem:[%s722 + $0x98] sm:$0xff]
        %v816 = vld [vmem:[%s722 + $0xa0] sm:$0xff]
        %v817 = vld [vmem:[%s722 + $0xa8] sm:$0xff]
        %v818 = vld [vmem:[%s722 + $0xb0] sm:$0xff]
        %v819 = vld [vmem:[%s722 + $0xb8] sm:$0xff]
        %v820 = vld [vmem:[%s722 + $0xc0] sm:$0xff]
        %v821 = vld [vmem:[%s722 + $0xc8] sm:$0xff]
        %v822 = vld [vmem:[%s722 + $0xd0] sm:$0xff]
        %v823 = vld [vmem:[%s722 + $0xd8] sm:$0xff]
        %v824 = vld [vmem:[%s722 + $0xe0] sm:$0xff]
        %v825 = vld [vmem:[%s722 + $0xe8] sm:$0xff]
        %v826 = vld [vmem:[%s722 + $0xf0] sm:$0xff]
        %v827 = vld [vmem:[%s722 + $0xf8] sm:$0xff]
        %v828 = vld [vmem:[%s729] sm:$0xff]
        %v829 = vld [vmem:[%s729 + $0x8] sm:$0xff]
        %v830 = vld [vmem:[%s729 + $0x10] sm:$0xff]
        %v831 = vld [vmem:[%s729 + $0x18] sm:$0xff]
        %v832 = vld [vmem:[%s729 + $0x20] sm:$0xff]
        %v833 = vld [vmem:[%s729 + $0x28] sm:$0xff]
        %v834 = vld [vmem:[%s729 + $0x30] sm:$0xff]
        %v835 = vld [vmem:[%s729 + $0x38] sm:$0xff]
        %v836 = vld [vmem:[%s729 + $0x40] sm:$0xff]
        %v837 = vld [vmem:[%s729 + $0x48] sm:$0xff]
        %v838 = vld [vmem:[%s729 + $0x50] sm:$0xff]
        %v839 = vld [vmem:[%s729 + $0x58] sm:$0xff]
        %v840 = vld [vmem:[%s729 + $0x60] sm:$0xff]
        %v841 = vld [vmem:[%s729 + $0x68] sm:$0xff]
        %v842 = vld [vmem:[%s729 + $0x70] sm:$0xff]
        %v843 = vld [vmem:[%s729 + $0x78] sm:$0xff]
        %v844 = vld [vmem:[%s729 + $0x80] sm:$0xff]
        %v845 = vld [vmem:[%s729 + $0x88] sm:$0xff]
        %v846 = vld [vmem:[%s729 + $0x90] sm:$0xff]
        %v847 = vld [vmem:[%s729 + $0x98] sm:$0xff]
        %v848 = vld [vmem:[%s729 + $0xa0] sm:$0xff]
        %v849 = vld [vmem:[%s729 + $0xa8] sm:$0xff]
        %v850 = vld [vmem:[%s729 + $0xb0] sm:$0xff]
        %v851 = vld [vmem:[%s729 + $0xb8] sm:$0xff]
        %v852 = vld [vmem:[%s729 + $0xc0] sm:$0xff]
        %v853 = vld [vmem:[%s729 + $0xc8] sm:$0xff]
        %v854 = vld [vmem:[%s729 + $0xd0] sm:$0xff]
        %v855 = vld [vmem:[%s729 + $0xd8] sm:$0xff]
        %v856 = vld [vmem:[%s729 + $0xe0] sm:$0xff]
        %v857 = vld [vmem:[%s729 + $0xe8] sm:$0xff]
        %v858 = vld [vmem:[%s729 + $0xf0] sm:$0xff]
        %v859 = vld [vmem:[%s729 + $0xf8] sm:$0xff]
        %864 = vrot.lane.b32.xlu0 %v787, 127
        %v865 = vpop.permute.xlu0 %864
        %866 = vrot.lane.b32.xlu0 %v788, 127
        %v867 = vpop.permute.xlu0 %866
        %868 = vrot.lane.b32.xlu0 %v789, 127
        %v869 = vpop.permute.xlu0 %868
        %870 = vrot.lane.b32.xlu0 %v790, 127
        %v871 = vpop.permute.xlu0 %870
        %v876 = vlaneseq
        %v877 = vshrl.u32 %v876, 7
        %v878 = vsub.s32 0, %v877
        %v879 = vrot.slane %v791, %v878
        %v880 = vmul.f32 %v865, %v879
        %v881 = vmul.f32 %v867, %v879
        %v882 = vmul.f32 %v869, %v879
        %v883 = vmul.f32 %v871, %v879
        %884 = vrot.lane.b32.xlu0 %v787, 1
        %v885 = vpop.permute.xlu0 %884
        %886 = vrot.lane.b32.xlu0 %v788, 1
        %v887 = vpop.permute.xlu0 %886
        %888 = vrot.lane.b32.xlu0 %v789, 1
        %v889 = vpop.permute.xlu0 %888
        %890 = vrot.lane.b32.xlu0 %v790, 1
        %v891 = vpop.permute.xlu0 %890
        %v896 = vlaneseq
        %v897 = vshrl.u32 %v896, 7
        %v898 = vsub.s32 1, %v897
        %v899 = vrot.slane %v791, %v898
        %v900 = vmul.f32 %v885, %v899
        %v901 = vmul.f32 %v887, %v899
        %v902 = vmul.f32 %v889, %v899
        %v903 = vmul.f32 %v891, %v899
        %904 = vrot.lane.b32.xlu0 %v787, 112
        %v905 = vpop.permute.xlu0 %904
        %906 = vrot.lane.b32.xlu0 %v788, 112
        %v907 = vpop.permute.xlu0 %906
        %908 = vrot.lane.b32.xlu0 %v789, 112
        %v909 = vpop.permute.xlu0 %908
        %910 = vrot.lane.b32.xlu0 %v790, 112
        %v911 = vpop.permute.xlu0 %910
        %v948 = vrot.slane %v829, 7
        %vm949 = vcmask 1041409
        %v950 = vsel %vm949, %v948, %v828
        %v951 = vrot.slane %v830, 6
        %vm952 = vcmask 1042434
        %v953 = vsel %vm952, %v951, %v950
        %v954 = vrot.slane %v831, 5
        %vm955 = vcmask 1043459
        %v956 = vsel %vm955, %v954, %v953
        %v957 = vrot.slane %v832, 4
        %vm958 = vcmask 1044484
        %v959 = vsel %vm958, %v957, %v956
        %v960 = vrot.slane %v833, 3
        %vm961 = vcmask 1045509
        %v962 = vsel %vm961, %v960, %v959
        %v963 = vrot.slane %v834, 2
        %vm964 = vcmask 1046534
        %v965 = vsel %vm964, %v963, %v962
        %v966 = vrot.slane %v835, 1
        %vm967 = vcmask 1047559
        %v968 = vsel %vm967, %v966, %v965
        %v969 = vrot.slane %v837, 7
        %v970 = vsel %vm949, %v969, %v836
        %v971 = vrot.slane %v838, 6
        %v972 = vsel %vm952, %v971, %v970
        %v973 = vrot.slane %v839, 5
        %v974 = vsel %vm955, %v973, %v972
        %v975 = vrot.slane %v840, 4
        %v976 = vsel %vm958, %v975, %v974
        %v977 = vrot.slane %v841, 3
        %v978 = vsel %vm961, %v977, %v976
        %v979 = vrot.slane %v842, 2
        %v980 = vsel %vm964, %v979, %v978
        %v981 = vrot.slane %v843, 1
        %v982 = vsel %vm967, %v981, %v980
        %v983 = vrot.slane %v845, 7
        %v984 = vsel %vm949, %v983, %v844
        %v985 = vrot.slane %v846, 6
        %v986 = vsel %vm952, %v985, %v984
        %v987 = vrot.slane %v847, 5
        %v988 = vsel %vm955, %v987, %v986
        %v989 = vrot.slane %v848, 4
        %v990 = vsel %vm958, %v989, %v988
        %v991 = vrot.slane %v849, 3
        %v992 = vsel %vm961, %v991, %v990
        %v993 = vrot.slane %v850, 2
        %v994 = vsel %vm964, %v993, %v992
        %v995 = vrot.slane %v851, 1
        %v996 = vsel %vm967, %v995, %v994
        %v997 = vrot.slane %v853, 7
        %v998 = vsel %vm949, %v997, %v852
        %v999 = vrot.slane %v854, 6
        %v1000 = vsel %vm952, %v999, %v998
        %v1001 = vrot.slane %v855, 5
        %v1002 = vsel %vm955, %v1001, %v1000
        %v1003 = vrot.slane %v856, 4
        %v1004 = vsel %vm958, %v1003, %v1002
        %v1005 = vrot.slane %v857, 3
        %v1006 = vsel %vm961, %v1005, %v1004
        %v1007 = vrot.slane %v858, 2
        %v1008 = vsel %vm964, %v1007, %v1006
        %v1009 = vrot.slane %v859, 1
        %v1010 = vsel %vm967, %v1009, %v1008
        %1011 = vrot.lane.b32.xlu0 %v968, 112
        %v1012 = vpop.permute.xlu0 %1011
        %1013 = vrot.lane.b32.xlu0 %v982, 112
        %v1014 = vpop.permute.xlu0 %1013
        %1015 = vrot.lane.b32.xlu0 %v996, 112
        %v1016 = vpop.permute.xlu0 %1015
        %1017 = vrot.lane.b32.xlu0 %v1010, 112
        %v1018 = vpop.permute.xlu0 %1017
        %vm1023 = vcmask 916480
        %v1024 = vsel %vm1023, %v905, %v1012
        %v1025 = vsel %vm1023, %v907, %v1014
        %v1026 = vsel %vm1023, %v909, %v1016
        %v1027 = vsel %vm1023, %v911, %v1018
        %v1028 = vlaneseq
        %v1029 = vshrl.u32 %v1028, 7
        %v1030 = vsub.s32 2, %v1029
        %v1031 = vrot.slane %v791, %v1030
        %v1032 = vmul.f32 %v1024, %v1031
        %v1033 = vmul.f32 %v1025, %v1031
        %v1034 = vmul.f32 %v1026, %v1031
        %v1035 = vmul.f32 %v1027, %v1031
        %v1068 = vrot.slane %v797, 7
        %v1069 = vrot.slane %v798, 6
        %v1070 = vsel %vm949, %v1069, %v1068
        %v1071 = vrot.slane %v799, 5
        %v1072 = vsel %vm952, %v1071, %v1070
        %v1073 = vrot.slane %v800, 4
        %v1074 = vsel %vm955, %v1073, %v1072
        %v1075 = vrot.slane %v801, 3
        %v1076 = vsel %vm958, %v1075, %v1074
        %v1077 = vrot.slane %v802, 2
        %v1078 = vsel %vm961, %v1077, %v1076
        %v1079 = vrot.slane %v803, 1
        %v1080 = vsel %vm964, %v1079, %v1078
        %v1081 = vsel %vm967, %v804, %v1080
        %v1082 = vrot.slane %v805, 7
        %v1083 = vrot.slane %v806, 6
        %v1084 = vsel %vm949, %v1083, %v1082
        %v1085 = vrot.slane %v807, 5
        %v1086 = vsel %vm952, %v1085, %v1084
        %v1087 = vrot.slane %v808, 4
        %v1088 = vsel %vm955, %v1087, %v1086
        %v1089 = vrot.slane %v809, 3
        %v1090 = vsel %vm958, %v1089, %v1088
        %v1091 = vrot.slane %v810, 2
        %v1092 = vsel %vm961, %v1091, %v1090
        %v1093 = vrot.slane %v811, 1
        %v1094 = vsel %vm964, %v1093, %v1092
        %v1095 = vsel %vm967, %v812, %v1094
        %v1096 = vrot.slane %v813, 7
        %v1097 = vrot.slane %v814, 6
        %v1098 = vsel %vm949, %v1097, %v1096
        %v1099 = vrot.slane %v815, 5
        %v1100 = vsel %vm952, %v1099, %v1098
        %v1101 = vrot.slane %v816, 4
        %v1102 = vsel %vm955, %v1101, %v1100
        %v1103 = vrot.slane %v817, 3
        %v1104 = vsel %vm958, %v1103, %v1102
        %v1105 = vrot.slane %v818, 2
        %v1106 = vsel %vm961, %v1105, %v1104
        %v1107 = vrot.slane %v819, 1
        %v1108 = vsel %vm964, %v1107, %v1106
        %v1109 = vsel %vm967, %v820, %v1108
        %v1110 = vrot.slane %v821, 7
        %v1111 = vrot.slane %v822, 6
        %v1112 = vsel %vm949, %v1111, %v1110
        %v1113 = vrot.slane %v823, 5
        %v1114 = vsel %vm952, %v1113, %v1112
        %v1115 = vrot.slane %v824, 4
        %v1116 = vsel %vm955, %v1115, %v1114
        %v1117 = vrot.slane %v825, 3
        %v1118 = vsel %vm958, %v1117, %v1116
        %v1119 = vrot.slane %v826, 2
        %v1120 = vsel %vm961, %v1119, %v1118
        %v1121 = vrot.slane %v827, 1
        %v1122 = vsel %vm964, %v1121, %v1120
        %vm1128 = vcmask 1046528
        %v1129 = vrot.slane %v787, 1
        %v1130 = vrot.slane %v788, 1
        %v1131 = vsel %vm1128, %v1129, %v1130
        %v1132 = vrot.slane %v789, 1
        %v1133 = vsel %vm1128, %v1130, %v1132
        %v1134 = vrot.slane %v790, 1
        %v1135 = vsel %vm1128, %v1132, %v1134
        %1136 = vrot.lane.b32.xlu0 %v1129, 16
        %v1137 = vpop.permute.xlu0 %1136
        %1138 = vrot.lane.b32.xlu0 %v1131, 16
        %v1139 = vpop.permute.xlu0 %1138
        %1140 = vrot.lane.b32.xlu0 %v1133, 16
        %v1141 = vpop.permute.xlu0 %1140
        %1142 = vrot.lane.b32.xlu0 %v1135, 16
        %v1143 = vpop.permute.xlu0 %1142
        %1144 = vrot.lane.b32.xlu0 %v1134, 16
        %v1145 = vpop.permute.xlu0 %1144
        %vm1151 = vcmask 130048
        %v1152 = vsel %vm1151, %v796, %v1137
        %v1153 = vsel %vm1151, %v1081, %v1139
        %v1154 = vsel %vm1151, %v1095, %v1141
        %v1155 = vsel %vm1151, %v1109, %v1143
        %v1156 = vsel %vm1151, %v1122, %v1145
        %v1157 = vlaneseq
        %v1158 = vshrl.u32 %v1157, 7
        %v1159 = vsub.s32 3, %v1158
        %v1160 = vrot.slane %v791, %v1159
        %v1161 = vmul.f32 %v1152, %v1160
        %v1162 = vmul.f32 %v1153, %v1160
        %v1163 = vmul.f32 %v1154, %v1160
        %v1164 = vmul.f32 %v1155, %v1160
        %v1165 = vmul.f32 %v1156, %v1160
        %1167 = vset.pattern.permute.xlu0 0
        %1168 = vperm.xlu0 %1167, %v792
        %v1169 = vpop.permute.xlu0 %1168
        %1172 = vset.pattern.permute.xlu0 0
        %1173 = vperm.xlu0 %1172, %v793
        %v1174 = vpop.permute.xlu0 %1173
        %1177 = vset.pattern.permute.xlu0 0
        %1178 = vperm.xlu0 %1177, %v794
        %v1179 = vpop.permute.xlu0 %1178
        %1182 = vset.pattern.permute.xlu0 0
        %1183 = vperm.xlu0 %1182, %v795
        %v1184 = vpop.permute.xlu0 %1183
        %v1186 = vmul.f32 %v1169, %v880
        %v1187 = vmul.f32 %v1174, %v881
        %v1188 = vmul.f32 %v1179, %v882
        %v1189 = vmul.f32 %v1184, %v883
        %1190 = vset.pattern.permute.xlu0 1
        %1191 = vperm.xlu0 %1190, %v792
        %v1192 = vpop.permute.xlu0 %1191
        %1194 = vset.pattern.permute.xlu0 1
        %1195 = vperm.xlu0 %1194, %v793
        %v1196 = vpop.permute.xlu0 %1195
        %1198 = vset.pattern.permute.xlu0 1
        %1199 = vperm.xlu0 %1198, %v794
        %v1200 = vpop.permute.xlu0 %1199
        %1202 = vset.pattern.permute.xlu0 1
        %1203 = vperm.xlu0 %1202, %v795
        %v1204 = vpop.permute.xlu0 %1203
        %v1206 = vmul.f32 %v1192, %v900
        %v1207 = vmul.f32 %v1196, %v901
        %v1208 = vmul.f32 %v1200, %v902
        %v1209 = vmul.f32 %v1204, %v903
        %v1210 = vadd.f32 %v1186, %v1206
        %v1211 = vadd.f32 %v1187, %v1207
        %v1212 = vadd.f32 %v1188, %v1208
        %v1213 = vadd.f32 %v1189, %v1209
        %1214 = vset.pattern.permute.xlu0 2
        %1215 = vperm.xlu0 %1214, %v792
        %v1216 = vpop.permute.xlu0 %1215
        %1218 = vset.pattern.permute.xlu0 2
        %1219 = vperm.xlu0 %1218, %v793
        %v1220 = vpop.permute.xlu0 %1219
        %1222 = vset.pattern.permute.xlu0 2
        %1223 = vperm.xlu0 %1222, %v794
        %v1224 = vpop.permute.xlu0 %1223
        %1226 = vset.pattern.permute.xlu0 2
        %1227 = vperm.xlu0 %1226, %v795
        %v1228 = vpop.permute.xlu0 %1227
        %v1230 = vmul.f32 %v1216, %v1032
        %v1231 = vmul.f32 %v1220, %v1033
        %v1232 = vmul.f32 %v1224, %v1034
        %v1233 = vmul.f32 %v1228, %v1035
        %v1234 = vadd.f32 %v1210, %v1230
        %v1235 = vadd.f32 %v1211, %v1231
        %v1236 = vadd.f32 %v1212, %v1232
        %v1237 = vadd.f32 %v1213, %v1233
        %1238 = vset.pattern.permute.xlu0 3
        %1239 = vperm.xlu0 %1238, %v792
        %v1240 = vpop.permute.xlu0 %1239
        %1242 = vset.pattern.permute.xlu0 3
        %1243 = vperm.xlu0 %1242, %v793
        %v1244 = vpop.permute.xlu0 %1243
        %1246 = vset.pattern.permute.xlu0 3
        %1247 = vperm.xlu0 %1246, %v794
        %v1248 = vpop.permute.xlu0 %1247
        %1250 = vset.pattern.permute.xlu0 3
        %1251 = vperm.xlu0 %1250, %v795
        %v1252 = vpop.permute.xlu0 %1251
        %vm1259 = vcmask 1040384
        %v1260 = vrot.slane %v1161, 7
        %v1261 = vrot.slane %v1162, 7
        %v1262 = vsel %vm1259, %v1260, %v1261
        %v1263 = vrot.slane %v1163, 7
        %v1264 = vsel %vm1259, %v1261, %v1263
        %v1265 = vrot.slane %v1164, 7
        %v1266 = vsel %vm1259, %v1263, %v1265
        %v1267 = vrot.slane %v1165, 7
        %v1268 = vsel %vm1259, %v1265, %v1267
        %v1273 = vmul.f32 %v1240, %v1262
        %v1274 = vmul.f32 %v1244, %v1264
        %v1275 = vmul.f32 %v1248, %v1266
        %v1276 = vmul.f32 %v1252, %v1268
        %v1277 = vadd.f32 %v1234, %v1273
        %v1278 = vadd.f32 %v1235, %v1274
        %v1279 = vadd.f32 %v1236, %v1275
        %v1280 = vadd.f32 %v1237, %v1276
        %1281 = vset.pattern.permute.xlu0 4
        %1282 = vperm.xlu0 %1281, %v792
        %v1283 = vpop.permute.xlu0 %1282
        %1285 = vset.pattern.permute.xlu0 4
        %1286 = vperm.xlu0 %1285, %v793
        %v1287 = vpop.permute.xlu0 %1286
        %1289 = vset.pattern.permute.xlu0 4
        %1290 = vperm.xlu0 %1289, %v794
        %v1291 = vpop.permute.xlu0 %1290
        %1293 = vset.pattern.permute.xlu0 4
        %1294 = vperm.xlu0 %1293, %v795
        %v1295 = vpop.permute.xlu0 %1294
        %v1297 = vmul.f32 %v1283, %v787
        %v1298 = vmul.f32 %v1287, %v788
        %v1299 = vmul.f32 %v1291, %v789
        %v1300 = vmul.f32 %v1295, %v790
        %v1301 = vadd.f32 %v1277, %v1297
        %v1302 = vadd.f32 %v1278, %v1298
        %v1303 = vadd.f32 %v1279, %v1299
        %v1304 = vadd.f32 %v1280, %v1300
        %v1305 = vld [vmem:[%s5] sm:$0xff]
        %v1306 = vld [vmem:[%s5 + $0x8] sm:$0xff]
        %v1307 = vld [vmem:[%s5 + $0x10] sm:$0xff]
        %v1308 = vld [vmem:[%s5 + $0x18] sm:$0xff]
        %v1309 = vld [vmem:[%s6] sm:$0xff]
        %v1310 = vld [vmem:[%s6 + $0x8] sm:$0xff]
        %v1311 = vld [vmem:[%s6 + $0x10] sm:$0xff]
        %v1312 = vld [vmem:[%s6 + $0x18] sm:$0xff]
        %1314 = vset.pattern.permute.xlu0 0
        %1315 = vperm.xlu0 %1314, %v1309
        %v1316 = vpop.permute.xlu0 %1315
        %1319 = vset.pattern.permute.xlu0 0
        %1320 = vperm.xlu0 %1319, %v1310
        %v1321 = vpop.permute.xlu0 %1320
        %1324 = vset.pattern.permute.xlu0 0
        %1325 = vperm.xlu0 %1324, %v1311
        %v1326 = vpop.permute.xlu0 %1325
        %1329 = vset.pattern.permute.xlu0 0
        %1330 = vperm.xlu0 %1329, %v1312
        %v1331 = vpop.permute.xlu0 %1330
        %vm1333 = vcmask 261120
        %v1335 = vsel %vm1333, %v1305, 0
        %v1338 = vsel %vm1333, %v1306, 0
        %v1341 = vsel %vm1333, %v1307, 0
        %v1344 = vsel %vm1333, %v1308, 0
        %1346 = vmatprep.subr.mxu0 0.0
        %1347 = vmatpush1.msra.mxu0 0.0
        %1348 = vmatprep.subr.mxu0 0.0
        %1349 = vmatpush1.msra.mxu0 0.0
        %1350 = vmatprep.subr.mxu0 0.0
        %1351 = vmatpush1.msra.mxu0 0.0
        %1352 = vmatprep.subr.mxu0 0.0
        %1353 = vmatpush1.msra.mxu0 0.0
        %1354 = vmatprep.subr.mxu0 0.0
        %1355 = vmatpush1.msra.mxu0 0.0
        %1356 = vmatprep.subr.mxu0 0.0
        %1357 = vmatpush1.msra.mxu0 0.0
        %1358 = vmatprep.subr.mxu0 0.0
        %1359 = vmatpush1.msra.mxu0 0.0
        %1360 = vmatprep.subr.mxu0 0.0
        %1361 = vmatpush1.msra.mxu0 0.0
        %1362 = vmatprep.subr.mxu0 0.0
        %1363 = vmatpush1.msra.mxu0 0.0
        %1364 = vmatprep.subr.mxu0 0.0
        %1365 = vmatpush1.msra.mxu0 0.0
        %1366 = vmatprep.subr.mxu0 0.0
        %1367 = vmatpush1.msra.mxu0 0.0
        %1368 = vmatprep.subr.mxu0 0.0
        %1369 = vmatpush1.msra.mxu0 0.0
        %1370 = vmatprep.subr.mxu0 0.0
        %1371 = vmatpush1.msra.mxu0 %v1304
        %1372 = vmatprep.subr.mxu0 0.0
        %1373 = vmatpush1.msra.mxu0 %v1303
        %1374 = vmatprep.subr.mxu0 0.0
        %1375 = vmatpush1.msra.mxu0 %v1302
        %1376 = vmatprep.subr.mxu0 0.0
        %1377 = vmatpush1.msra.mxu0 %v1301
        %1378 = vmatprep.subr.mxu0 0.0
        %1379 = vmatpush2.msra.mxu0 0.0
        %1380 = vmatprep.subr.mxu0 0.0
        %1381 = vmatpush2.msra.mxu0 0.0
        %1382 = vmatprep.subr.mxu0 0.0
        %1383 = vmatpush2.msra.mxu0 0.0
        %1384 = vmatprep.subr.mxu0 0.0
        %1385 = vmatpush2.msra.mxu0 0.0
        %1386 = vmatprep.subr.mxu0 0.0
        %1387 = vmatpush2.msra.mxu0 0.0
        %1388 = vmatprep.subr.mxu0 0.0
        %1389 = vmatpush2.msra.mxu0 0.0
        %1390 = vmatprep.subr.mxu0 0.0
        %1391 = vmatpush2.msra.mxu0 0.0
        %1392 = vmatprep.subr.mxu0 0.0
        %1393 = vmatpush2.msra.mxu0 0.0
        %1394 = vmatprep.subr.mxu0 0.0
        %1395 = vmatpush2.msra.mxu0 0.0
        %1396 = vmatprep.subr.mxu0 0.0
        %1397 = vmatpush2.msra.mxu0 0.0
        %1398 = vmatprep.subr.mxu0 0.0
        %1399 = vmatpush2.msra.mxu0 0.0
        %1400 = vmatprep.subr.mxu0 0.0
        %1401 = vmatpush2.msra.mxu0 0.0
        %1402 = vmatprep.subr.mxu0 0.0
        %1403 = vmatpush2.msra.mxu0 0.0
        %1404 = vmatprep.subr.mxu0 0.0
        %1405 = vmatpush2.msra.mxu0 0.0
        %1406 = vmatprep.subr.mxu0 0.0
        %1407 = vmatpush2.msra.mxu0 0.0
        %1408 = vmatprep.subr.mxu0 0.0
        %1409 = vmatpush2.msra.mxu0 0.0
        %1410 = vmatprep.mubr.f32.mxu0 0.0
        %1411 = vmatmul.mubr.f32.gmra.mxu0 %v1335
        %v1412 = vpop.f32.mrf.mxu0
        %v1413 = vadd.f32 %v1316, %v1412
        %v1414 = vpop.f32.mrf.mxu0
        %1415 = vmatprep.mubr.f32.mxu0 0.0
        %1416 = vmatmul.mubr.f32.gmra.mxu0 %v1338
        %v1417 = vpop.f32.mrf.mxu0
        %v1418 = vadd.f32 %v1321, %v1417
        %v1419 = vpop.f32.mrf.mxu0
        %1420 = vmatprep.mubr.f32.mxu0 0.0
        %1421 = vmatmul.mubr.f32.gmra.mxu0 %v1341
        %v1422 = vpop.f32.mrf.mxu0
        %v1423 = vadd.f32 %v1326, %v1422
        %v1424 = vpop.f32.mrf.mxu0
        %1425 = vmatprep.mubr.f32.mxu0 0.0
        %1426 = vmatmul.mubr.f32.gmra.mxu0 %v1344
        %v1427 = vpop.f32.mrf.mxu0
        %v1428 = vadd.f32 %v1331, %v1427
        %v1429 = vpop.f32.mrf.mxu0
        %1430 = vdwg.mxu0
        %1431 = vst [vmem:[%s769] sm:$0xff] %v1413
        %1432 = vst [vmem:[%s769 + $0x8] sm:$0xff] %v1418
        %1433 = vst [vmem:[%s769 + $0x10] sm:$0xff] %v1423
        %1434 = vst [vmem:[%s769 + $0x18] sm:$0xff] %v1428
        %p1435 = scmp.eq.s32.totalorder %s31, 0
        // Predicated region
        $region163: #{tpu_custom_call.1} parent=149 // pred_check
          %p1436 = pneg %p1435
        $region164: #{tpu_custom_call.1} parent=149 // pred_check_branch
          %1438 = sbr.rel (%p1436) target = $region166
        $region165: #{tpu_custom_call.1} parent=149 // pred_region
          %1439 = vst [vmem:[%s776] sm:$0xff] 0.0
          %1440 = vst [vmem:[%s776 + $0x8] sm:$0xff] 0.0
          %1441 = vst [vmem:[%s776 + $0x10] sm:$0xff] 0.0
          %1442 = vst [vmem:[%s776 + $0x18] sm:$0xff] 0.0
        $region166: #{tpu_custom_call.1} parent=149 // pred_fallthru
          _
        %v1443 = vld [vmem:[%s776] sm:$0xff]
        %v1444 = vld [vmem:[%s776 + $0x8] sm:$0xff]
        %v1445 = vld [vmem:[%s776 + $0x10] sm:$0xff]
        %v1446 = vld [vmem:[%s776 + $0x18] sm:$0xff]
        %1447 = vadd.xlane.f32.xlu0 %v1413
        %v1448 = vpop.xlane.xlu0 %1447
        %1449 = vadd.xlane.f32.xlu0 %v1418
        %v1450 = vpop.xlane.xlu0 %1449
        %1451 = vadd.xlane.f32.xlu0 %v1423
        %v1452 = vpop.xlane.xlu0 %1451
        %1453 = vadd.xlane.f32.xlu0 %v1428
        %v1454 = vpop.xlane.xlu0 %1453
        %v1455 = vadd.f32 %v1443, %v1448
        %v1456 = vadd.f32 %v1444, %v1450
        %v1457 = vadd.f32 %v1445, %v1452
        %v1458 = vadd.f32 %v1446, %v1454
        %1459 = vst [vmem:[%s776] sm:$0xff] %v1455
        %1460 = vst [vmem:[%s776 + $0x8] sm:$0xff] %v1456
        %1461 = vst [vmem:[%s776 + $0x10] sm:$0xff] %v1457
        %1462 = vst [vmem:[%s776 + $0x18] sm:$0xff] %v1458
        %s1463 = sand.u32 %s233, 1
        %s1464 = scalar_lea.sflag [#allocation6], %s1463
        %s1465 = sand.u32 %s233, 1
        %s1466 = smul.addr %s1465, 32
        %s1467 = scalar_lea.vmem [#allocation5], %s1466
        %s1468 = sand.u32 %s259, 1
        %s1469 = scalar_lea.sflag [#allocation8], %s1468
        %s1470 = sand.u32 %s259, 1
        %s1471 = smul.addr %s1470, 32
        %s1472 = scalar_lea.vmem [#allocation7], %s1471
        // Predicated region
        $region167: #{tpu_custom_call.1} parent=149 // pred_check
          %p1473 = pneg %p243
        $region168: #{tpu_custom_call.1} parent=149 // pred_check_branch
          %1475 = sbr.rel (%p1473) target = $region170
        $region169: #{tpu_custom_call.1} parent=149 // pred_region
          %s1477 = ssub.s32 512, 512
          %1478 = vsyncadd %s1464, %s1477
          %s1479 = smul.addr %s30, 8
          %s1480 = sadd.s32 %s31, %s1479
          %s1481 = smul.addr %s1480, 128
          %s1482 = scalar_lea.hbm %s7, %s1481
          %s1483 = sshll.u32 %s1467, 4
          %s1484 = int_to_ptr.vmem [resolvable:$true] %s1483
          %1489 = dma.vmem_to_hbm [thread:$0]  %s1484, 512, %s1482, %s1464, 128, 256, 8
        $region170: #{tpu_custom_call.1} parent=149 // pred_fallthru
          _
        // Predicated region
        $region171: #{tpu_custom_call.1} parent=149 // pred_check
          %p1490 = pneg %p269
        $region172: #{tpu_custom_call.1} parent=149 // pred_check_branch
          %1492 = sbr.rel (%p1490) target = $region174
        $region173: #{tpu_custom_call.1} parent=149 // pred_region
          %s1494 = ssub.s32 512, 512
          %1495 = vsyncadd %s1469, %s1494
          %s1496 = smul.addr %s30, 4
          %s1497 = smul.addr %s1496, 128
          %s1498 = scalar_lea.hbm %s8, %s1497
          %s1499 = sshll.u32 %s1472, 4
          %s1500 = int_to_ptr.vmem [resolvable:$true] %s1499
          %1505 = dma.vmem_to_hbm [thread:$0]  %s1500, 512, %s1498, %s1469, 128, 128, 8
        $region174: #{tpu_custom_call.1} parent=149 // pred_fallthru
          _
      $region150: #{tpu_custom_call.1} parent=5 // pred_fallthru
        _
      %p1506 = scmp.le.s32.totalorder 2, %s21
      // Predicated region
      $region175: #{tpu_custom_call.1} parent=5 // pred_check
        %p1507 = pneg %p1506
      $region176: #{tpu_custom_call.1} parent=5 // pred_check_branch
        %1509 = sbr.rel (%p1507) target = $region178
      $region177: #{tpu_custom_call.1} parent=5 // pred_region
        %s1510 = ssub.s32 %s21, 2
        // Predicated region
        $region179: #{tpu_custom_call.1} parent=177 // pred_check
          %p1511 = pneg %p249
        $region180: #{tpu_custom_call.1} parent=177 // pred_check_branch
          %1513 = sbr.rel (%p1511) target = $region182
        $region181: #{tpu_custom_call.1} parent=177 // pred_region
          %s1514 = sand.u32 %s234, 1
          %s1515 = scalar_lea.sflag [#allocation6], %s1514
          %s1516 = sand.u32 %s234, 1
          %s1517 = smul.addr %s1516, 32
          %s1518 = scalar_lea.vmem [#allocation5], %s1517
          %1519 = dma.done %s1515, 512
        $region182: #{tpu_custom_call.1} parent=177 // pred_fallthru
          _
        // Predicated region
        $region183: #{tpu_custom_call.1} parent=177 // pred_check
          %p1520 = pneg %p275
        $region184: #{tpu_custom_call.1} parent=177 // pred_check_branch
          %1522 = sbr.rel (%p1520) target = $region186
        $region185: #{tpu_custom_call.1} parent=177 // pred_region
          %s1523 = sand.u32 %s260, 1
          %s1524 = scalar_lea.sflag [#allocation8], %s1523
          %s1525 = sand.u32 %s260, 1
          %s1526 = smul.addr %s1525, 32
          %s1527 = scalar_lea.vmem [#allocation7], %s1526
          %1528 = dma.done %s1524, 512
        $region186: #{tpu_custom_call.1} parent=177 // pred_fallthru
          _
      $region178: #{tpu_custom_call.1} parent=5 // pred_fallthru
        _
    $region6: #{tpu_custom_call.1} parent=1 // loop_footer
      %s25 = sadd.s32 1, %s21
    $region7: #{tpu_custom_call.1} parent=1 // loop_footer_branch
      %20 = sbr.rel target = $region3
    $region8: #{tpu_custom_call.1} parent=1 // loop_exit
      _
    %1529 = vsyncpa [#allocation6], 1
    %s1530 = scalar_lea.sflag [#allocation6], 1
    %1531 = vsyncpa %s1530, 1
    %1532 = vsyncpa [#allocation8], 1
    %s1533 = scalar_lea.sflag [#allocation8], 1
    %1534 = vsyncpa %s1533, 1

</llo_original>
